<compile_context>
chip_gen: v7x
topology: tpu7x:2x2x1
jax: 0.10.0
libtpu: 0.0.40
codegen_flags: <defaults>
</compile_context>

<pallas_src>
import functools

import jax
import jax.numpy as jnp
from jax.experimental import pallas as pl
from jax.experimental.pallas import tpu as pltpu


IN_CH, STEM_CH, EXP_CH, PROJ_CH, FEAT_CH = 3, 16, 96, 32, 64
EXP_PAD = 128          # expanded / depthwise stage padded to a full 128-lane vreg
HEAD_PAD = 128         # fused species+genus head padded to a lane-dense 128-wide slab
NUM_CLASSES = (10, 5)  # (species, genus)


# ----------------------------------------------------------------------------
# helpers
# ----------------------------------------------------------------------------
def _im2col(x_pad, kh, kw, stride):
    """x_pad: (B, Hp, Wp, C) NHWC padded input -> (B, oh*ow, kh*kw*C) patches."""
    b, hp, wp, c = x_pad.shape
    oh = (hp - kh) // stride + 1
    ow = (wp - kw) // stride + 1
    cols = []
    for i in range(kh):
        for j in range(kw):
            cols.append(x_pad[:, i:i + stride * oh:stride, j:j + stride * ow:stride, :])
    patches = jnp.concatenate(cols, axis=-1)            # (B, oh, ow, kh*kw*C)
    return patches.reshape(b, oh * ow, kh * kw * c), oh, ow


def _choose_nb(b):
    # Keep >= 2 grid steps so the "parallel" batch axis actually shards across v7x's
    # two TensorCores; cap the per-step batch at 8 to bound VMEM-resident values.
    return max(1, min(8, b // 2))


# ----------------------------------------------------------------------------
# Fused Pallas kernel: full backbone + pooled heads, NB images per grid step
# ----------------------------------------------------------------------------
def _fused_kernel(patch_ref,
                  stem_w_ref, stem_b_ref,
                  exp_w_ref, exp_b_ref,
                  dw_w_ref, dw_b_ref,
                  proj_w_ref, proj_b_ref,
                  last_w_ref, last_b_ref,
                  head_w_ref, head_b_ref,
                  out_ref,
                  pad_ref,
                  *, nb, oh, ow):
    m = oh * ow
    kp = patch_ref.shape[-1]
    c = pad_ref.shape[-1]                # EXP_PAD (lane-dense)
    feat_c = last_w_ref.shape[-1]

    def mm(a_f32, w_ref):
        # bf16 MXU dot, f32 accumulate.  BN scale is pre-folded into w_ref.
        return jnp.dot(a_f32.astype(jnp.bfloat16), w_ref[...],
                       preferred_element_type=jnp.float32)

    # --- stem 3x3/s2 conv (im2col matmul) + folded BN + ReLU6 ---
    patches = patch_ref[...].reshape(nb * m, kp)                 # bf16, M = nb*oh*ow
    stem = jnp.dot(patches, stem_w_ref[...],
                   preferred_element_type=jnp.float32)
    stem = jnp.clip(stem + stem_b_ref[...], 0.0, 6.0)            # (nb*m, 16)

    # --- inverted residual: expand 1x1 + BN + ReLU6 (lane-dense 128 wide) ---
    exp = jnp.clip(mm(stem, exp_w_ref) + exp_b_ref[...], 0.0, 6.0)   # (nb*m, 128)

    # --- depthwise 3x3 (stride 1, pad 1) on a VMEM-resident halo scratch.
    #     Only the halo perimeter is re-zeroed; the interior is fully overwritten,
    #     so the scratch is valid every step regardless of which TensorCore ran it.
    zero_row = jnp.zeros((nb, 1, ow + 2, c), jnp.float32)
    zero_col = jnp.zeros((nb, oh, 1, c), jnp.float32)
    pad_ref[:, 0:1, :, :] = zero_row
    pad_ref[:, oh + 1:oh + 2, :, :] = zero_row
    pad_ref[:, 1:oh + 1, 0:1, :] = zero_col
    pad_ref[:, 1:oh + 1, ow + 1:ow + 2, :] = zero_col
    pad_ref[:, 1:oh + 1, 1:ow + 1, :] = exp.reshape(nb, oh, ow, c)

    dww = dw_w_ref[...]                                          # (3, 3, c) f32, scale folded
    acc = jnp.zeros((nb, oh, ow, c), jnp.float32)
    for di in range(3):
        for dj in range(3):
            acc = acc + (pad_ref[:, di:di + oh, dj:dj + ow, :]
                         * dww[di:di + 1, dj:dj + 1, :])
    dwo = jnp.clip(acc + dw_b_ref[...], 0.0, 6.0).reshape(nb * m, c)

    # --- project 1x1 + BN (linear bottleneck, no activation) ---
    proj = mm(dwo, proj_w_ref) + proj_b_ref[...]                 # (nb*m, 32)

    # --- last 1x1 conv to feature width + BN + ReLU6 ---
    last = jnp.clip(mm(proj, last_w_ref) + last_b_ref[...], 0.0, 6.0)   # (nb*m, 64)

    # --- per-image global average pool + both heads fused (lane-dense 128 slab) ---
    feat = jnp.mean(last.reshape(nb, m, feat_c), axis=1)         # (nb, 64)
    logits = jnp.dot(feat.astype(jnp.bfloat16), head_w_ref[...],
                     preferred_element_type=jnp.float32) + head_b_ref[...]  # (nb, 128)
    out_ref[...] = logits[:, None, :].astype(out_ref.dtype)


def _shroomnet_fused(patches, stem_w, stem_b, exp_w, exp_b, dw_w, dw_b,
                     proj_w, proj_b, last_w, last_b, head_w, head_b,
                     *, nb, oh, ow):
    bp, m, kp = patches.shape
    nsteps = bp // nb
    nout = head_w.shape[1]

    def wspec(a):
        n = a.ndim
        return pl.BlockSpec(a.shape, lambda i, n=n: (0,) * n)    # resident weights

    weights = (stem_w, stem_b, exp_w, exp_b, dw_w, dw_b,
               proj_w, proj_b, last_w, last_b, head_w, head_b)

    return pl.pallas_call(
        functools.partial(_fused_kernel, nb=nb, oh=oh, ow=ow),
        out_shape=jax.ShapeDtypeStruct((bp, 1, nout), jnp.float32),
        grid=(nsteps,),
        in_specs=[pl.BlockSpec((nb, m, kp), lambda i: (i, 0, 0))]
                 + [wspec(a) for a in weights],
        out_specs=pl.BlockSpec((nb, 1, nout), lambda i: (i, 0, 0)),
        scratch_shapes=[pltpu.VMEM((nb, oh + 2, ow + 2, EXP_PAD), jnp.float32)],
        compiler_params=pltpu.CompilerParams(
            dimension_semantics=("parallel",)),   # >= 2 steps -> both v7x TensorCores
    )(patches, *weights)


# ----------------------------------------------------------------------------
# ShroomNet: parameters + forward
# ----------------------------------------------------------------------------
def init_params(key):
    ks = jax.random.split(key, 17)
    n = lambda k, shp, sc=0.1: (sc * jax.random.normal(k, shp)).astype(jnp.float32)
    bn_s = lambda k, c: (1.0 + 0.01 * jax.random.normal(k, (c,))).astype(jnp.float32)
    species, genus = NUM_CLASSES
    return {
        # stem 3x3/s2 conv (im2col weight layout: (kh*kw*Cin, Cout)) + folded BN
        "stem_w": n(ks[0], (9 * IN_CH, STEM_CH)),
        "stem_scale": bn_s(ks[1], STEM_CH), "stem_bias": n(ks[2], (STEM_CH,)),
        # inverted residual: expand 1x1
        "exp_w": n(ks[3], (STEM_CH, EXP_CH)),
        "exp_scale": bn_s(ks[4], EXP_CH), "exp_bias": n(ks[5], (EXP_CH,)),
        # depthwise 3x3
        "dw_w": n(ks[6], (3, 3, EXP_CH)),
        "dw_scale": bn_s(ks[7], EXP_CH), "dw_bias": n(ks[8], (EXP_CH,)),
        # project 1x1 (linear bottleneck, no activation)
        "proj_w": n(ks[9], (EXP_CH, PROJ_CH)),
        "proj_scale": bn_s(ks[10], PROJ_CH), "proj_bias": n(ks[11], (PROJ_CH,)),
        # last 1x1 conv to feature width (torchvision's 1280 reduced to FEAT_CH)
        "last_w": n(ks[12], (PROJ_CH, FEAT_CH)),
        "last_scale": bn_s(ks[13], FEAT_CH), "last_bias": n(ks[16], (FEAT_CH,)),
        # heads (stored as (in, out) == Linear.weight.T)
        "species_w": n(ks[14], (FEAT_CH, species)),
        "species_b": jnp.zeros((species,), jnp.float32),
        "genus_w": n(ks[15], (FEAT_CH, genus)),
        "genus_b": jnp.zeros((genus,), jnp.float32),
    }


@jax.jit
def shroomnet_forward(params, x_nchw):
    # x_nchw: (B, 3, H, W) float32 (PyTorch layout) -> NHWC internally.
    x = jnp.transpose(x_nchw, (0, 2, 3, 1)).astype(jnp.float32)
    b = x.shape[0]
    xp = jnp.pad(x, ((0, 0), (1, 1), (1, 1), (0, 0)))
    patches, oh, ow = _im2col(xp, 3, 3, 2)                      # (B, oh*ow, 27)

    # Pad the stem contraction dim to a multiple of 8 for clean bf16 MXU tiling.
    k = patches.shape[-1]
    kpad = (-k) % 8
    patches = jnp.pad(patches, ((0, 0), (0, 0), (0, kpad))).astype(jnp.bfloat16)

    # Batch-block: NB images per grid step; pad the batch to a multiple of NB.
    nb = _choose_nb(b)
    bpad = (-b) % nb
    if bpad:
        patches = jnp.pad(patches, ((0, bpad), (0, 0), (0, 0)))

    f32 = jnp.float32
    bf = lambda a: a.astype(jnp.bfloat16)

    def row(a, width=None):
        if width is not None:
            a = jnp.pad(a, (0, width - a.shape[0]))
        return a.reshape(1, -1).astype(f32)

    # Fold BN scales into the matmul / depthwise weights; pad the expanded stage to
    # 128 lanes (zeros: dead lanes stay zero through expand -> dw -> project).
    stem_w = bf(jnp.pad(params["stem_w"] * params["stem_scale"], ((0, kpad), (0, 0))))
    exp_w = bf(jnp.pad(params["exp_w"] * params["exp_scale"],
                       ((0, 0), (0, EXP_PAD - EXP_CH))))
    dw_w = jnp.pad(params["dw_w"] * params["dw_scale"],
                   ((0, 0), (0, 0), (0, EXP_PAD - EXP_CH))).astype(f32)
    proj_w = bf(jnp.pad(params["proj_w"] * params["proj_scale"],
                        ((0, EXP_PAD - EXP_CH), (0, 0))))
    last_w = bf(params["last_w"] * params["last_scale"])

    # Lane-dense single head slab: species and genus heads share one dot; padded to
    # 128 output lanes so the final store / writeback DMA is unmasked.
    head_w = jnp.concatenate([params["species_w"], params["genus_w"]], axis=1)
    ncls = head_w.shape[1]
    head_w = bf(jnp.pad(head_w, ((0, 0), (0, HEAD_PAD - ncls))))
    head_b = row(jnp.concatenate([params["species_b"], params["genus_b"]]), HEAD_PAD)

    logits = _shroomnet_fused(
        patches,
        stem_w, row(params["stem_bias"]),
        exp_w, row(params["exp_bias"], EXP_PAD),
        dw_w, row(params["dw_bias"], EXP_PAD),
        proj_w, row(params["proj_bias"]),
        last_w, row(params["last_bias"]),
        head_w, head_b,
        nb=nb, oh=oh, ow=ow)[:b, 0, :]

    ns, ng = NUM_CLASSES
    return logits[:, :ns], logits[:, ns:ns + ng]


def shroomnet_reference(params, x_nchw):
    """Pure-JAX (XLA) reference using bf16 matmuls with f32 BN epilogues."""
    bf = lambda a: a.astype(jnp.bfloat16)
    mm = lambda a, w: jnp.dot(bf(a), bf(w), preferred_element_type=jnp.float32)

    x = jnp.transpose(x_nchw, (0, 2, 3, 1)).astype(jnp.float32)
    b = x.shape[0]
    xp = jnp.pad(x, ((0, 0), (1, 1), (1, 1), (0, 0)))
    patches, oh, ow = _im2col(xp, 3, 3, 2)
    y = jnp.clip(mm(patches, params["stem_w"]) * params["stem_scale"]
                 + params["stem_bias"], 0.0, 6.0)
    y = jnp.clip(mm(y, params["exp_w"]) * params["exp_scale"]
                 + params["exp_bias"], 0.0, 6.0)
    y3 = jnp.pad(y.reshape(b, oh, ow, EXP_CH), ((0, 0), (1, 1), (1, 1), (0, 0)))
    acc = jnp.zeros((b, oh, ow, EXP_CH), jnp.float32)
    for dh in range(3):
        for dw in range(3):
            acc = acc + y3[:, dh:dh + oh, dw:dw + ow, :] * params["dw_w"][dh, dw]
    y = jnp.clip(acc * params["dw_scale"] + params["dw_bias"], 0.0, 6.0)
    y = y.reshape(b, oh * ow, EXP_CH)
    y = mm(y, params["proj_w"]) * params["proj_scale"] + params["proj_bias"]
    y = jnp.clip(mm(y, params["last_w"]) * params["last_scale"]
                 + params["last_bias"], 0.0, 6.0)
    feat = jnp.mean(y, axis=1)
    out_s = mm(feat, params["species_w"]) + params["species_b"]
    out_g = mm(feat, params["genus_w"]) + params["genus_b"]
    return out_s, out_g


if __name__ == "__main__":
    # batch=4 exercises the batch-blocked path (NB=2, grid of 2 parallel steps).
    x = jax.random.normal(jax.random.PRNGKey(0), (4, IN_CH, 16, 16), dtype=jnp.float32)
    params = init_params(jax.random.PRNGKey(42))

    out_species, out_genus = shroomnet_forward(params, x)
    jax.block_until_ready((out_species, out_genus))

    assert out_species.shape == (4, NUM_CLASSES[0])
    assert out_genus.shape == (4, NUM_CLASSES[1])
    assert jnp.all(jnp.isfinite(out_species)) and jnp.all(jnp.isfinite(out_genus))

    # Tolerance slightly relaxed vs. the f32-scale reference because the kernel folds
    # BN scales into bf16 weights (tiny extra rounding).
    ref_species, ref_genus = shroomnet_reference(params, x)
    assert jnp.allclose(out_species, ref_species, rtol=2e-2, atol=2e-2)
    assert jnp.allclose(out_genus, ref_genus, rtol=2e-2, atol=2e-2)
    print("KERNEL_OK")
</pallas_src>

<mosaic_0001>
module attributes {stable_mosaic.version = 11 : i64} {
  func.func @_fused_kernel(%arg0: i32, %arg1: memref<2x64x32xbf16, #tpu.memory_space<vmem>>, %arg2: memref<32x16xbf16, #tpu.memory_space<vmem>>, %arg3: memref<1x16xf32, #tpu.memory_space<vmem>>, %arg4: memref<16x128xbf16, #tpu.memory_space<vmem>>, %arg5: memref<1x128xf32, #tpu.memory_space<vmem>>, %arg6: memref<3x3x128xf32, #tpu.memory_space<vmem>>, %arg7: memref<1x128xf32, #tpu.memory_space<vmem>>, %arg8: memref<128x32xbf16, #tpu.memory_space<vmem>>, %arg9: memref<1x32xf32, #tpu.memory_space<vmem>>, %arg10: memref<32x64xbf16, #tpu.memory_space<vmem>>, %arg11: memref<1x64xf32, #tpu.memory_space<vmem>>, %arg12: memref<64x128xbf16, #tpu.memory_space<vmem>>, %arg13: memref<1x128xf32, #tpu.memory_space<vmem>>, %arg14: memref<2x1x128xf32, #tpu.memory_space<vmem>>, %arg15: memref<2x10x10x128xf32, #tpu.memory_space<vmem>>) attributes {dimension_semantics = [#tpu.dimension_semantics<parallel>], iteration_bounds = array<i64: 2>, scalar_prefetch = 0 : i64, scratch_operands = 1 : i64, tpu.core_type = #tpu.core_type<tc>, window_params = [{transform_indices = @transform_0, window_bounds = array<i64: 2, 64, 32>}, {pipeline_mode = #tpu.pipeline_mode<synchronous>, transform_indices = @transform_1, window_bounds = array<i64: 32, 16>}, {pipeline_mode = #tpu.pipeline_mode<synchronous>, transform_indices = @transform_2, window_bounds = array<i64: 1, 16>}, {pipeline_mode = #tpu.pipeline_mode<synchronous>, transform_indices = @transform_3, window_bounds = array<i64: 16, 128>}, {pipeline_mode = #tpu.pipeline_mode<synchronous>, transform_indices = @transform_4, window_bounds = array<i64: 1, 128>}, {pipeline_mode = #tpu.pipeline_mode<synchronous>, transform_indices = @transform_5, window_bounds = array<i64: 3, 3, 128>}, {pipeline_mode = #tpu.pipeline_mode<synchronous>, transform_indices = @transform_6, window_bounds = array<i64: 1, 128>}, {pipeline_mode = #tpu.pipeline_mode<synchronous>, transform_indices = @transform_7, window_bounds = array<i64: 128, 32>}, {pipeline_mode = #tpu.pipeline_mode<synchronous>, transform_indices = @transform_8, window_bounds = array<i64: 1, 32>}, {pipeline_mode = #tpu.pipeline_mode<synchronous>, transform_indices = @transform_9, window_bounds = array<i64: 32, 64>}, {pipeline_mode = #tpu.pipeline_mode<synchronous>, transform_indices = @transform_10, window_bounds = array<i64: 1, 64>}, {pipeline_mode = #tpu.pipeline_mode<synchronous>, transform_indices = @transform_11, window_bounds = array<i64: 64, 128>}, {pipeline_mode = #tpu.pipeline_mode<synchronous>, transform_indices = @transform_12, window_bounds = array<i64: 1, 128>}, {transform_indices = @transform_13, window_bounds = array<i64: 2, 1, 128>}]} {
    %c0 = arith.constant 0 : index
    %c0_0 = arith.constant 0 : index
    %c0_1 = arith.constant 0 : index
    %0 = vector.load %arg1[%c0, %c0_0, %c0_1] : memref<2x64x32xbf16, #tpu.memory_space<vmem>>, vector<2x64x32xbf16>
    %1 = vector.shape_cast %0 : vector<2x64x32xbf16> to vector<128x32xbf16>
    %c0_2 = arith.constant 0 : index
    %c0_3 = arith.constant 0 : index
    %2 = vector.load %arg2[%c0_2, %c0_3] : memref<32x16xbf16, #tpu.memory_space<vmem>>, vector<32x16xbf16>
    %cst = arith.constant dense<0.000000e+00> : vector<128x16xf32>
    %3 = tpu.matmul %1, %2, %cst {dimension_numbers = #tpu.dot_dimension_numbers<[1], [0], [0], [1], [0, 0, 1, 1], [], []>} : vector<128x32xbf16>, vector<32x16xbf16>, vector<128x16xf32> -> vector<128x16xf32>
    %c0_4 = arith.constant 0 : index
    %c0_5 = arith.constant 0 : index
    %4 = vector.load %arg3[%c0_4, %c0_5] : memref<1x16xf32, #tpu.memory_space<vmem>>, vector<1x16xf32>
    %5 = vector.broadcast %4 : vector<1x16xf32> to vector<128x16xf32>
    %6 = arith.addf %3, %5 : vector<128x16xf32>
    %cst_6 = arith.constant 0.000000e+00 : f32
    %cst_7 = arith.constant 6.000000e+00 : f32
    %7 = vector.broadcast %cst_6 : f32 to vector<128x16xf32>
    %8 = arith.maximumf %7, %6 : vector<128x16xf32>
    %9 = vector.broadcast %cst_7 : f32 to vector<128x16xf32>
    %10 = arith.minimumf %9, %8 : vector<128x16xf32>
    %11 = arith.truncf %10 : vector<128x16xf32> to vector<128x16xbf16>
    %c0_8 = arith.constant 0 : index
    %c0_9 = arith.constant 0 : index
    %12 = vector.load %arg4[%c0_8, %c0_9] : memref<16x128xbf16, #tpu.memory_space<vmem>>, vector<16x128xbf16>
    %cst_10 = arith.constant dense<0.000000e+00> : vector<128x128xf32>
    %13 = tpu.matmul %11, %12, %cst_10 {dimension_numbers = #tpu.dot_dimension_numbers<[1], [0], [0], [1], [0, 0, 1, 1], [], []>} : vector<128x16xbf16>, vector<16x128xbf16>, vector<128x128xf32> -> vector<128x128xf32>
    %c0_11 = arith.constant 0 : index
    %c0_12 = arith.constant 0 : index
    %14 = vector.load %arg5[%c0_11, %c0_12] : memref<1x128xf32, #tpu.memory_space<vmem>>, vector<1x128xf32>
    %15 = vector.broadcast %14 : vector<1x128xf32> to vector<128x128xf32>
    %16 = arith.addf %13, %15 : vector<128x128xf32>
    %cst_13 = arith.constant 0.000000e+00 : f32
    %cst_14 = arith.constant 6.000000e+00 : f32
    %17 = vector.broadcast %cst_13 : f32 to vector<128x128xf32>
    %18 = arith.maximumf %17, %16 : vector<128x128xf32>
    %19 = vector.broadcast %cst_14 : f32 to vector<128x128xf32>
    %20 = arith.minimumf %19, %18 : vector<128x128xf32>
    %cst_15 = arith.constant 0.000000e+00 : f32
    %21 = vector.broadcast %cst_15 : f32 to vector<2x1x10x128xf32>
    %cst_16 = arith.constant 0.000000e+00 : f32
    %22 = vector.broadcast %cst_16 : f32 to vector<2x8x1x128xf32>
    %c0_17 = arith.constant 0 : index
    %c0_18 = arith.constant 0 : index
    %c0_19 = arith.constant 0 : index
    %c0_20 = arith.constant 0 : index
    %23 = vector.load %arg15[%c0_17, %c0_18, %c0_19, %c0_20] : memref<2x10x10x128xf32, #tpu.memory_space<vmem>>, vector<2x1x10x128xf32>
    tpu.vector_store %arg15[%c0_17, %c0_18, %c0_19, %c0_20], %21 {strides = array<i32>} : memref<2x10x10x128xf32, #tpu.memory_space<vmem>>, vector<2x1x10x128xf32>,
    %c0_21 = arith.constant 0 : index
    %c9 = arith.constant 9 : index
    %c0_22 = arith.constant 0 : index
    %c0_23 = arith.constant 0 : index
    %24 = vector.load %arg15[%c0_21, %c9, %c0_22, %c0_23] : memref<2x10x10x128xf32, #tpu.memory_space<vmem>>, vector<2x1x10x128xf32>
    tpu.vector_store %arg15[%c0_21, %c9, %c0_22, %c0_23], %21 {strides = array<i32>} : memref<2x10x10x128xf32, #tpu.memory_space<vmem>>, vector<2x1x10x128xf32>,
    %c0_24 = arith.constant 0 : index
    %c1 = arith.constant 1 : index
    %c0_25 = arith.constant 0 : index
    %c0_26 = arith.constant 0 : index
    %25 = vector.load %arg15[%c0_24, %c1, %c0_25, %c0_26] : memref<2x10x10x128xf32, #tpu.memory_space<vmem>>, vector<2x8x1x128xf32>
    tpu.vector_store %arg15[%c0_24, %c1, %c0_25, %c0_26], %22 {strides = array<i32>} : memref<2x10x10x128xf32, #tpu.memory_space<vmem>>, vector<2x8x1x128xf32>,
    %c0_27 = arith.constant 0 : index
    %c1_28 = arith.constant 1 : index
    %c9_29 = arith.constant 9 : index
    %c0_30 = arith.constant 0 : index
    %26 = vector.load %arg15[%c0_27, %c1_28, %c9_29, %c0_30] : memref<2x10x10x128xf32, #tpu.memory_space<vmem>>, vector<2x8x1x128xf32>
    tpu.vector_store %arg15[%c0_27, %c1_28, %c9_29, %c0_30], %22 {strides = array<i32>} : memref<2x10x10x128xf32, #tpu.memory_space<vmem>>, vector<2x8x1x128xf32>,
    %27 = vector.shape_cast %20 : vector<128x128xf32> to vector<2x8x8x128xf32>
    %c0_31 = arith.constant 0 : index
    %c1_32 = arith.constant 1 : index
    %c1_33 = arith.constant 1 : index
    %c0_34 = arith.constant 0 : index
    %28 = vector.load %arg15[%c0_31, %c1_32, %c1_33, %c0_34] : memref<2x10x10x128xf32, #tpu.memory_space<vmem>>, vector<2x8x8x128xf32>
    tpu.vector_store %arg15[%c0_31, %c1_32, %c1_33, %c0_34], %27 {strides = array<i32>} : memref<2x10x10x128xf32, #tpu.memory_space<vmem>>, vector<2x8x8x128xf32>,
    %c0_35 = arith.constant 0 : index
    %c0_36 = arith.constant 0 : index
    %c0_37 = arith.constant 0 : index
    %29 = vector.load %arg6[%c0_35, %c0_36, %c0_37] : memref<3x3x128xf32, #tpu.memory_space<vmem>>, vector<3x3x128xf32>
    %cst_38 = arith.constant 0.000000e+00 : f32
    %30 = vector.broadcast %cst_38 : f32 to vector<2x8x8x128xf32>
    %c0_39 = arith.constant 0 : index
    %c0_40 = arith.constant 0 : index
    %c0_41 = arith.constant 0 : index
    %c0_42 = arith.constant 0 : index
    %31 = vector.load %arg15[%c0_39, %c0_40, %c0_41, %c0_42] : memref<2x10x10x128xf32, #tpu.memory_space<vmem>>, vector<2x8x8x128xf32>
    %32 = vector.extract_strided_slice %29 {offsets = [0, 0, 0], sizes = [1, 1, 128], strides = [1, 1, 1]} : vector<3x3x128xf32> to vector<1x1x128xf32>
    %33 = vector.shape_cast %32 : vector<1x1x128xf32> to vector<1x1x1x128xf32>
    %34 = vector.broadcast %33 : vector<1x1x1x128xf32> to vector<2x8x8x128xf32>
    %35 = arith.mulf %31, %34 : vector<2x8x8x128xf32>
    %36 = arith.addf %30, %35 : vector<2x8x8x128xf32>
    %c0_43 = arith.constant 0 : index
    %c0_44 = arith.constant 0 : index
    %c1_45 = arith.constant 1 : index
    %c0_46 = arith.constant 0 : index
    %37 = vector.load %arg15[%c0_43, %c0_44, %c1_45, %c0_46] : memref<2x10x10x128xf32, #tpu.memory_space<vmem>>, vector<2x8x8x128xf32>
    %38 = vector.extract_strided_slice %29 {offsets = [0, 1, 0], sizes = [1, 1, 128], strides = [1, 1, 1]} : vector<3x3x128xf32> to vector<1x1x128xf32>
    %39 = vector.shape_cast %38 : vector<1x1x128xf32> to vector<1x1x1x128xf32>
    %40 = vector.broadcast %39 : vector<1x1x1x128xf32> to vector<2x8x8x128xf32>
    %41 = arith.mulf %37, %40 : vector<2x8x8x128xf32>
    %42 = arith.addf %36, %41 : vector<2x8x8x128xf32>
    %c0_47 = arith.constant 0 : index
    %c0_48 = arith.constant 0 : index
    %c2 = arith.constant 2 : index
    %c0_49 = arith.constant 0 : index
    %43 = vector.load %arg15[%c0_47, %c0_48, %c2, %c0_49] : memref<2x10x10x128xf32, #tpu.memory_space<vmem>>, vector<2x8x8x128xf32>
    %44 = vector.extract_strided_slice %29 {offsets = [0, 2, 0], sizes = [1, 1, 128], strides = [1, 1, 1]} : vector<3x3x128xf32> to vector<1x1x128xf32>
    %45 = vector.shape_cast %44 : vector<1x1x128xf32> to vector<1x1x1x128xf32>
    %46 = vector.broadcast %45 : vector<1x1x1x128xf32> to vector<2x8x8x128xf32>
    %47 = arith.mulf %43, %46 : vector<2x8x8x128xf32>
    %48 = arith.addf %42, %47 : vector<2x8x8x128xf32>
    %c0_50 = arith.constant 0 : index
    %c1_51 = arith.constant 1 : index
    %c0_52 = arith.constant 0 : index
    %c0_53 = arith.constant 0 : index
    %49 = vector.load %arg15[%c0_50, %c1_51, %c0_52, %c0_53] : memref<2x10x10x128xf32, #tpu.memory_space<vmem>>, vector<2x8x8x128xf32>
    %50 = vector.extract_strided_slice %29 {offsets = [1, 0, 0], sizes = [1, 1, 128], strides = [1, 1, 1]} : vector<3x3x128xf32> to vector<1x1x128xf32>
    %51 = vector.shape_cast %50 : vector<1x1x128xf32> to vector<1x1x1x128xf32>
    %52 = vector.broadcast %51 : vector<1x1x1x128xf32> to vector<2x8x8x128xf32>
    %53 = arith.mulf %49, %52 : vector<2x8x8x128xf32>
    %54 = arith.addf %48, %53 : vector<2x8x8x128xf32>
    %c0_54 = arith.constant 0 : index
    %c1_55 = arith.constant 1 : index
    %c1_56 = arith.constant 1 : index
    %c0_57 = arith.constant 0 : index
    %55 = vector.load %arg15[%c0_54, %c1_55, %c1_56, %c0_57] : memref<2x10x10x128xf32, #tpu.memory_space<vmem>>, vector<2x8x8x128xf32>
    %56 = vector.extract_strided_slice %29 {offsets = [1, 1, 0], sizes = [1, 1, 128], strides = [1, 1, 1]} : vector<3x3x128xf32> to vector<1x1x128xf32>
    %57 = vector.shape_cast %56 : vector<1x1x128xf32> to vector<1x1x1x128xf32>
    %58 = vector.broadcast %57 : vector<1x1x1x128xf32> to vector<2x8x8x128xf32>
    %59 = arith.mulf %55, %58 : vector<2x8x8x128xf32>
    %60 = arith.addf %54, %59 : vector<2x8x8x128xf32>
    %c0_58 = arith.constant 0 : index
    %c1_59 = arith.constant 1 : index
    %c2_60 = arith.constant 2 : index
    %c0_61 = arith.constant 0 : index
    %61 = vector.load %arg15[%c0_58, %c1_59, %c2_60, %c0_61] : memref<2x10x10x128xf32, #tpu.memory_space<vmem>>, vector<2x8x8x128xf32>
    %62 = vector.extract_strided_slice %29 {offsets = [1, 2, 0], sizes = [1, 1, 128], strides = [1, 1, 1]} : vector<3x3x128xf32> to vector<1x1x128xf32>
    %63 = vector.shape_cast %62 : vector<1x1x128xf32> to vector<1x1x1x128xf32>
    %64 = vector.broadcast %63 : vector<1x1x1x128xf32> to vector<2x8x8x128xf32>
    %65 = arith.mulf %61, %64 : vector<2x8x8x128xf32>
    %66 = arith.addf %60, %65 : vector<2x8x8x128xf32>
    %c0_62 = arith.constant 0 : index
    %c2_63 = arith.constant 2 : index
    %c0_64 = arith.constant 0 : index
    %c0_65 = arith.constant 0 : index
    %67 = vector.load %arg15[%c0_62, %c2_63, %c0_64, %c0_65] : memref<2x10x10x128xf32, #tpu.memory_space<vmem>>, vector<2x8x8x128xf32>
    %68 = vector.extract_strided_slice %29 {offsets = [2, 0, 0], sizes = [1, 1, 128], strides = [1, 1, 1]} : vector<3x3x128xf32> to vector<1x1x128xf32>
    %69 = vector.shape_cast %68 : vector<1x1x128xf32> to vector<1x1x1x128xf32>
    %70 = vector.broadcast %69 : vector<1x1x1x128xf32> to vector<2x8x8x128xf32>
    %71 = arith.mulf %67, %70 : vector<2x8x8x128xf32>
    %72 = arith.addf %66, %71 : vector<2x8x8x128xf32>
    %c0_66 = arith.constant 0 : index
    %c2_67 = arith.constant 2 : index
    %c1_68 = arith.constant 1 : index
    %c0_69 = arith.constant 0 : index
    %73 = vector.load %arg15[%c0_66, %c2_67, %c1_68, %c0_69] : memref<2x10x10x128xf32, #tpu.memory_space<vmem>>, vector<2x8x8x128xf32>
    %74 = vector.extract_strided_slice %29 {offsets = [2, 1, 0], sizes = [1, 1, 128], strides = [1, 1, 1]} : vector<3x3x128xf32> to vector<1x1x128xf32>
    %75 = vector.shape_cast %74 : vector<1x1x128xf32> to vector<1x1x1x128xf32>
    %76 = vector.broadcast %75 : vector<1x1x1x128xf32> to vector<2x8x8x128xf32>
    %77 = arith.mulf %73, %76 : vector<2x8x8x128xf32>
    %78 = arith.addf %72, %77 : vector<2x8x8x128xf32>
    %c0_70 = arith.constant 0 : index
    %c2_71 = arith.constant 2 : index
    %c2_72 = arith.constant 2 : index
    %c0_73 = arith.constant 0 : index
    %79 = vector.load %arg15[%c0_70, %c2_71, %c2_72, %c0_73] : memref<2x10x10x128xf32, #tpu.memory_space<vmem>>, vector<2x8x8x128xf32>
    %80 = vector.extract_strided_slice %29 {offsets = [2, 2, 0], sizes = [1, 1, 128], strides = [1, 1, 1]} : vector<3x3x128xf32> to vector<1x1x128xf32>
    %81 = vector.shape_cast %80 : vector<1x1x128xf32> to vector<1x1x1x128xf32>
    %82 = vector.broadcast %81 : vector<1x1x1x128xf32> to vector<2x8x8x128xf32>
    %83 = arith.mulf %79, %82 : vector<2x8x8x128xf32>
    %84 = arith.addf %78, %83 : vector<2x8x8x128xf32>
    %c0_74 = arith.constant 0 : index
    %c0_75 = arith.constant 0 : index
    %85 = vector.load %arg7[%c0_74, %c0_75] : memref<1x128xf32, #tpu.memory_space<vmem>>, vector<1x128xf32>
    %86 = vector.shape_cast %85 : vector<1x128xf32> to vector<1x1x1x128xf32>
    %87 = vector.broadcast %86 : vector<1x1x1x128xf32> to vector<2x8x8x128xf32>
    %88 = arith.addf %84, %87 : vector<2x8x8x128xf32>
    %cst_76 = arith.constant 0.000000e+00 : f32
    %cst_77 = arith.constant 6.000000e+00 : f32
    %89 = vector.broadcast %cst_76 : f32 to vector<2x8x8x128xf32>
    %90 = arith.maximumf %89, %88 : vector<2x8x8x128xf32>
    %91 = vector.broadcast %cst_77 : f32 to vector<2x8x8x128xf32>
    %92 = arith.minimumf %91, %90 : vector<2x8x8x128xf32>
    %93 = vector.shape_cast %92 : vector<2x8x8x128xf32> to vector<128x128xf32>
    %94 = arith.truncf %93 : vector<128x128xf32> to vector<128x128xbf16>
    %c0_78 = arith.constant 0 : index
    %c0_79 = arith.constant 0 : index
    %95 = vector.load %arg8[%c0_78, %c0_79] : memref<128x32xbf16, #tpu.memory_space<vmem>>, vector<128x32xbf16>
    %cst_80 = arith.constant dense<0.000000e+00> : vector<128x32xf32>
    %96 = tpu.matmul %94, %95, %cst_80 {dimension_numbers = #tpu.dot_dimension_numbers<[1], [0], [0], [1], [0, 0, 1, 1], [], []>} : vector<128x128xbf16>, vector<128x32xbf16>, vector<128x32xf32> -> vector<128x32xf32>
    %c0_81 = arith.constant 0 : index
    %c0_82 = arith.constant 0 : index
    %97 = vector.load %arg9[%c0_81, %c0_82] : memref<1x32xf32, #tpu.memory_space<vmem>>, vector<1x32xf32>
    %98 = vector.broadcast %97 : vector<1x32xf32> to vector<128x32xf32>
    %99 = arith.addf %96, %98 : vector<128x32xf32>
    %100 = arith.truncf %99 : vector<128x32xf32> to vector<128x32xbf16>
    %c0_83 = arith.constant 0 : index
    %c0_84 = arith.constant 0 : index
    %101 = vector.load %arg10[%c0_83, %c0_84] : memref<32x64xbf16, #tpu.memory_space<vmem>>, vector<32x64xbf16>
    %cst_85 = arith.constant dense<0.000000e+00> : vector<128x64xf32>
    %102 = tpu.matmul %100, %101, %cst_85 {dimension_numbers = #tpu.dot_dimension_numbers<[1], [0], [0], [1], [0, 0, 1, 1], [], []>} : vector<128x32xbf16>, vector<32x64xbf16>, vector<128x64xf32> -> vector<128x64xf32>
    %c0_86 = arith.constant 0 : index
    %c0_87 = arith.constant 0 : index
    %103 = vector.load %arg11[%c0_86, %c0_87] : memref<1x64xf32, #tpu.memory_space<vmem>>, vector<1x64xf32>
    %104 = vector.broadcast %103 : vector<1x64xf32> to vector<128x64xf32>
    %105 = arith.addf %102, %104 : vector<128x64xf32>
    %cst_88 = arith.constant 0.000000e+00 : f32
    %cst_89 = arith.constant 6.000000e+00 : f32
    %106 = vector.broadcast %cst_88 : f32 to vector<128x64xf32>
    %107 = arith.maximumf %106, %105 : vector<128x64xf32>
    %108 = vector.broadcast %cst_89 : f32 to vector<128x64xf32>
    %109 = arith.minimumf %108, %107 : vector<128x64xf32>
    %110 = vector.shape_cast %109 : vector<128x64xf32> to vector<2x64x64xf32>
    %cst_90 = arith.constant dense<0.000000e+00> : vector<2x64xf32>
    %111 = vector.multi_reduction <add>, %110, %cst_90 [1] : vector<2x64x64xf32> to vector<2x64xf32>
    %cst_91 = arith.constant 6.400000e+01 : f32
    %112 = vector.broadcast %cst_91 : f32 to vector<2x64xf32>
    %113 = arith.divf %111, %112 : vector<2x64xf32>
    %114 = arith.truncf %113 : vector<2x64xf32> to vector<2x64xbf16>
    %c0_92 = arith.constant 0 : index
    %c0_93 = arith.constant 0 : index
    %115 = vector.load %arg12[%c0_92, %c0_93] : memref<64x128xbf16, #tpu.memory_space<vmem>>, vector<64x128xbf16>
    %cst_94 = arith.constant dense<0.000000e+00> : vector<2x128xf32>
    %116 = tpu.matmul %114, %115, %cst_94 {dimension_numbers = #tpu.dot_dimension_numbers<[1], [0], [0], [1], [0, 0, 1, 1], [], []>} : vector<2x64xbf16>, vector<64x128xbf16>, vector<2x128xf32> -> vector<2x128xf32>
    %c0_95 = arith.constant 0 : index
    %c0_96 = arith.constant 0 : index
    %117 = vector.load %arg13[%c0_95, %c0_96] : memref<1x128xf32, #tpu.memory_space<vmem>>, vector<1x128xf32>
    %118 = vector.broadcast %117 : vector<1x128xf32> to vector<2x128xf32>
    %119 = arith.addf %116, %118 : vector<2x128xf32>
    %120 = vector.shape_cast %119 : vector<2x128xf32> to vector<2x1x128xf32>
    %c0_97 = arith.constant 0 : index
    %c0_98 = arith.constant 0 : index
    %c0_99 = arith.constant 0 : index
    %121 = vector.load %arg14[%c0_97, %c0_98, %c0_99] : memref<2x1x128xf32, #tpu.memory_space<vmem>>, vector<2x1x128xf32>
    tpu.vector_store %arg14[%c0_97, %c0_98, %c0_99], %120 {strides = array<i32>} : memref<2x1x128xf32, #tpu.memory_space<vmem>>, vector<2x1x128xf32>,
    return
  }
  func.func @transform_0(%arg0: i32) -> (i32, i32, i32) {
    %c0_i32 = arith.constant 0 : i32
    %c0_i32_0 = arith.constant 0 : i32
    %c0_i32_1 = arith.constant 0 : i32
    return %arg0, %c0_i32, %c0_i32_0 : i32, i32, i32
  }
  func.func @transform_1(%arg0: i32) -> (i32, i32) {
    %c0_i32 = arith.constant 0 : i32
    %c0_i32_0 = arith.constant 0 : i32
    %c0_i32_1 = arith.constant 0 : i32
    return %c0_i32, %c0_i32_0 : i32, i32
  }
  func.func @transform_2(%arg0: i32) -> (i32, i32) {
    %c0_i32 = arith.constant 0 : i32
    %c0_i32_0 = arith.constant 0 : i32
    %c0_i32_1 = arith.constant 0 : i32
    return %c0_i32, %c0_i32_0 : i32, i32
  }
  func.func @transform_3(%arg0: i32) -> (i32, i32) {
    %c0_i32 = arith.constant 0 : i32
    %c0_i32_0 = arith.constant 0 : i32
    %c0_i32_1 = arith.constant 0 : i32
    return %c0_i32, %c0_i32_0 : i32, i32
  }
  func.func @transform_4(%arg0: i32) -> (i32, i32) {
    %c0_i32 = arith.constant 0 : i32
    %c0_i32_0 = arith.constant 0 : i32
    %c0_i32_1 = arith.constant 0 : i32
    return %c0_i32, %c0_i32_0 : i32, i32
  }
  func.func @transform_5(%arg0: i32) -> (i32, i32, i32) {
    %c0_i32 = arith.constant 0 : i32
    %c0_i32_0 = arith.constant 0 : i32
    %c0_i32_1 = arith.constant 0 : i32
    %c0_i32_2 = arith.constant 0 : i32
    return %c0_i32, %c0_i32_0, %c0_i32_1 : i32, i32, i32
  }
  func.func @transform_6(%arg0: i32) -> (i32, i32) {
    %c0_i32 = arith.constant 0 : i32
    %c0_i32_0 = arith.constant 0 : i32
    %c0_i32_1 = arith.constant 0 : i32
    return %c0_i32, %c0_i32_0 : i32, i32
  }
  func.func @transform_7(%arg0: i32) -> (i32, i32) {
    %c0_i32 = arith.constant 0 : i32
    %c0_i32_0 = arith.constant 0 : i32
    %c0_i32_1 = arith.constant 0 : i32
    return %c0_i32, %c0_i32_0 : i32, i32
  }
  func.func @transform_8(%arg0: i32) -> (i32, i32) {
    %c0_i32 = arith.constant 0 : i32
    %c0_i32_0 = arith.constant 0 : i32
    %c0_i32_1 = arith.constant 0 : i32
    return %c0_i32, %c0_i32_0 : i32, i32
  }
  func.func @transform_9(%arg0: i32) -> (i32, i32) {
    %c0_i32 = arith.constant 0 : i32
    %c0_i32_0 = arith.constant 0 : i32
    %c0_i32_1 = arith.constant 0 : i32
    return %c0_i32, %c0_i32_0 : i32, i32
  }
  func.func @transform_10(%arg0: i32) -> (i32, i32) {
    %c0_i32 = arith.constant 0 : i32
    %c0_i32_0 = arith.constant 0 : i32
    %c0_i32_1 = arith.constant 0 : i32
    return %c0_i32, %c0_i32_0 : i32, i32
  }
  func.func @transform_11(%arg0: i32) -> (i32, i32) {
    %c0_i32 = arith.constant 0 : i32
    %c0_i32_0 = arith.constant 0 : i32
    %c0_i32_1 = arith.constant 0 : i32
    return %c0_i32, %c0_i32_0 : i32, i32
  }
  func.func @transform_12(%arg0: i32) -> (i32, i32) {
    %c0_i32 = arith.constant 0 : i32
    %c0_i32_0 = arith.constant 0 : i32
    %c0_i32_1 = arith.constant 0 : i32
    return %c0_i32, %c0_i32_0 : i32, i32
  }
  func.func @transform_13(%arg0: i32) -> (i32, i32, i32) {
    %c0_i32 = arith.constant 0 : i32
    %c0_i32_0 = arith.constant 0 : i32
    %c0_i32_1 = arith.constant 0 : i32
    return %arg0, %c0_i32, %c0_i32_0 : i32, i32, i32
  }
}

</mosaic_0001>

<llo_original>
// kernel: shroomnet_forward.1
$region0: #{shroomnet_forward.1}
  #allocation0 [shape = 'u32[]', space=smem, size = 0x4, offset = 0x4, fixed_abs, tag = 'smem constant byte address 0x4 - core index']
  #allocation1 [shape = 'u32[144,128]{1,0:T(1,128)}', space=vmem, size = 0x12000, scoped, tag = 'internal scratch']
  #allocation2 [shape = 'f32[2,10,10,128]{3,2,1,0:T(8,128)}', space=vmem, size = 0x28000, scoped, tag = 'scratch operand']
  %s0 = inlined_call_operand.vmem [shape: bf16[4,64,32], index: 0, kind: input, shape index: {}]
  %s1 = inlined_call_operand.vmem [shape: bf16[32,16], index: 1, kind: input, shape index: {}]
  %s2 = inlined_call_operand.vmem [shape: f32[1,16], index: 2, kind: input, shape index: {}]
  %s3 = inlined_call_operand.vmem [shape: bf16[16,128], index: 3, kind: input, shape index: {}]
  %s4 = inlined_call_operand.vmem [shape: f32[1,128], index: 4, kind: input, shape index: {}]
  %s5 = inlined_call_operand.vmem [shape: f32[3,3,128], index: 5, kind: input, shape index: {}]
  %s6 = inlined_call_operand.vmem [shape: f32[1,128], index: 6, kind: input, shape index: {}]
  %s7 = inlined_call_operand.vmem [shape: bf16[128,32], index: 7, kind: input, shape index: {}]
  %s8 = inlined_call_operand.vmem [shape: f32[1,32], index: 8, kind: input, shape index: {}]
  %s9 = inlined_call_operand.vmem [shape: bf16[32,64], index: 9, kind: input, shape index: {}]
  %s10 = inlined_call_operand.vmem [shape: f32[1,64], index: 10, kind: input, shape index: {}]
  %s11 = inlined_call_operand.vmem [shape: bf16[64,128], index: 11, kind: input, shape index: {}]
  %s12 = inlined_call_operand.vmem [shape: f32[1,128], index: 12, kind: input, shape index: {}]
  %s13 = inlined_call_operand.vmem [shape: f32[4,1,128], index: 13, kind: output, shape index: {}]
  %s14 = sld [smem:[#allocation0]]
  $region85: #{shroomnet_forward.1} parent=0
    _
  %s16 = ssub.s32 1, %s14
  %s17 = scalar_select 0, %s16, %s14
  loop: start=0, step=1, limit=4
  $region2: #{shroomnet_forward.1} parent=0 // loop_pre_header
    _
  $region3: #{shroomnet_forward.1} parent=0 // loop_header
    %s19 = sphi 0, %s23
    %p20 = scmp.ge.s32.totalorder %s19, 4
    %s29 = sphi 0, %s31
    %s32 = sphi 0, %s29
    %s33 = sphi 0, %s32
    %s49 = sphi 0, %s33
    %s53 = sphi 0, %s53
    %s55 = sphi 0, %s53
    %s56 = sphi 0, %s55
    %s70 = sphi 0, %s56
    %s74 = sphi 0, %s74
    %s76 = sphi 0, %s74
    %s77 = sphi 0, %s76
    %s91 = sphi 0, %s77
    %s95 = sphi 0, %s95
    %s97 = sphi 0, %s95
    %s98 = sphi 0, %s97
    %s112 = sphi 0, %s98
    %s116 = sphi 0, %s116
    %s118 = sphi 0, %s116
    %s119 = sphi 0, %s118
    %s133 = sphi 0, %s119
    %s137 = sphi 0, %s137
    %s139 = sphi 0, %s137
    %s140 = sphi 0, %s139
    %s154 = sphi 0, %s140
    %s158 = sphi 0, %s158
    %s160 = sphi 0, %s158
    %s161 = sphi 0, %s160
    %s175 = sphi 0, %s161
    %s179 = sphi 0, %s179
    %s181 = sphi 0, %s179
    %s182 = sphi 0, %s181
    %s196 = sphi 0, %s182
    %s200 = sphi 0, %s200
    %s202 = sphi 0, %s200
    %s203 = sphi 0, %s202
    %s217 = sphi 0, %s203
    %s221 = sphi 0, %s221
    %s223 = sphi 0, %s221
    %s224 = sphi 0, %s223
    %s238 = sphi 0, %s224
    %s242 = sphi 0, %s242
    %s244 = sphi 0, %s242
    %s245 = sphi 0, %s244
    %s259 = sphi 0, %s245
    %s263 = sphi 0, %s263
    %s265 = sphi 0, %s263
    %s266 = sphi 0, %s265
    %s280 = sphi 0, %s266
    %s284 = sphi 0, %s284
    %s286 = sphi 0, %s284
    %s287 = sphi 0, %s286
    %s301 = sphi 0, %s287
    %s307 = sphi 0, %s309
    %s310 = sphi 0, %s307
    %s311 = sphi 0, %s310
    %s327 = sphi 0, %s311
  $region4: #{shroomnet_forward.1} parent=0 // loop_header_branch
    %22 = sbr.rel (%p20) target = $region8
  $region5: #{shroomnet_forward.1} parent=0 // loop_body
    %s24 = ssub.s32 %s19, 1
    %s25 = ssub.s32 %s19, 2
    %s26 = sadd.s32 %s19, 1
    %s27 = ssub.s32 %s19, %s26
    %p28 = scmp.eq.s32.totalorder %s27, 0
    %s30 = sadd.s32 %s29, 1
    %s31 = scalar_select %p28, %s29, %s30
    %p34 = pneg %p28
    %p35 = scmp.eq.s32.totalorder %s19, 1
    %p36 = por %p34, %p35
    %p37 = scmp.ne.s32.totalorder %s29, %s32
    %p38 = scmp.eq.s32.totalorder %s19, 0
    %p39 = por %p37, %p38
    %p40 = scmp.ne.s32.totalorder %s29, %s32
    %p41 = scmp.eq.s32.totalorder %s24, 1
    %p42 = por %p40, %p41
    %p43 = scmp.ne.s32.totalorder %s32, %s33
    %p44 = scmp.eq.s32.totalorder %s24, 0
    %p45 = por %p43, %p44
    %p46 = scmp.ne.s32.totalorder %s32, %s33
    %p47 = scmp.eq.s32.totalorder %s25, 1
    %p48 = por %p46, %p47
    %p50 = scmp.ne.s32.totalorder %s33, %s49
    %p51 = scmp.eq.s32.totalorder %s25, 0
    %p52 = por %p50, %p51
    %s54 = sadd.s32 %s53, 1
    %p57 = scmp.eq.s32.totalorder %s19, 1
    %p58 = scmp.ne.s32.totalorder %s53, %s55
    %p59 = scmp.eq.s32.totalorder %s19, 0
    %p60 = por %p58, %p59
    %p61 = scmp.ne.s32.totalorder %s53, %s55
    %p62 = scmp.eq.s32.totalorder %s24, 1
    %p63 = por %p61, %p62
    %p64 = scmp.ne.s32.totalorder %s55, %s56
    %p65 = scmp.eq.s32.totalorder %s24, 0
    %p66 = por %p64, %p65
    %p67 = scmp.ne.s32.totalorder %s55, %s56
    %p68 = scmp.eq.s32.totalorder %s25, 1
    %p69 = por %p67, %p68
    %p71 = scmp.ne.s32.totalorder %s56, %s70
    %p72 = scmp.eq.s32.totalorder %s25, 0
    %p73 = por %p71, %p72
    %s75 = sadd.s32 %s74, 1
    %p78 = scmp.eq.s32.totalorder %s19, 1
    %p79 = scmp.ne.s32.totalorder %s74, %s76
    %p80 = scmp.eq.s32.totalorder %s19, 0
    %p81 = por %p79, %p80
    %p82 = scmp.ne.s32.totalorder %s74, %s76
    %p83 = scmp.eq.s32.totalorder %s24, 1
    %p84 = por %p82, %p83
    %p85 = scmp.ne.s32.totalorder %s76, %s77
    %p86 = scmp.eq.s32.totalorder %s24, 0
    %p87 = por %p85, %p86
    %p88 = scmp.ne.s32.totalorder %s76, %s77
    %p89 = scmp.eq.s32.totalorder %s25, 1
    %p90 = por %p88, %p89
    %p92 = scmp.ne.s32.totalorder %s77, %s91
    %p93 = scmp.eq.s32.totalorder %s25, 0
    %p94 = por %p92, %p93
    %s96 = sadd.s32 %s95, 1
    %p99 = scmp.eq.s32.totalorder %s19, 1
    %p100 = scmp.ne.s32.totalorder %s95, %s97
    %p101 = scmp.eq.s32.totalorder %s19, 0
    %p102 = por %p100, %p101
    %p103 = scmp.ne.s32.totalorder %s95, %s97
    %p104 = scmp.eq.s32.totalorder %s24, 1
    %p105 = por %p103, %p104
    %p106 = scmp.ne.s32.totalorder %s97, %s98
    %p107 = scmp.eq.s32.totalorder %s24, 0
    %p108 = por %p106, %p107
    %p109 = scmp.ne.s32.totalorder %s97, %s98
    %p110 = scmp.eq.s32.totalorder %s25, 1
    %p111 = por %p109, %p110
    %p113 = scmp.ne.s32.totalorder %s98, %s112
    %p114 = scmp.eq.s32.totalorder %s25, 0
    %p115 = por %p113, %p114
    %s117 = sadd.s32 %s116, 1
    %p120 = scmp.eq.s32.totalorder %s19, 1
    %p121 = scmp.ne.s32.totalorder %s116, %s118
    %p122 = scmp.eq.s32.totalorder %s19, 0
    %p123 = por %p121, %p122
    %p124 = scmp.ne.s32.totalorder %s116, %s118
    %p125 = scmp.eq.s32.totalorder %s24, 1
    %p126 = por %p124, %p125
    %p127 = scmp.ne.s32.totalorder %s118, %s119
    %p128 = scmp.eq.s32.totalorder %s24, 0
    %p129 = por %p127, %p128
    %p130 = scmp.ne.s32.totalorder %s118, %s119
    %p131 = scmp.eq.s32.totalorder %s25, 1
    %p132 = por %p130, %p131
    %p134 = scmp.ne.s32.totalorder %s119, %s133
    %p135 = scmp.eq.s32.totalorder %s25, 0
    %p136 = por %p134, %p135
    %s138 = sadd.s32 %s137, 1
    %p141 = scmp.eq.s32.totalorder %s19, 1
    %p142 = scmp.ne.s32.totalorder %s137, %s139
    %p143 = scmp.eq.s32.totalorder %s19, 0
    %p144 = por %p142, %p143
    %p145 = scmp.ne.s32.totalorder %s137, %s139
    %p146 = scmp.eq.s32.totalorder %s24, 1
    %p147 = por %p145, %p146
    %p148 = scmp.ne.s32.totalorder %s139, %s140
    %p149 = scmp.eq.s32.totalorder %s24, 0
    %p150 = por %p148, %p149
    %p151 = scmp.ne.s32.totalorder %s139, %s140
    %p152 = scmp.eq.s32.totalorder %s25, 1
    %p153 = por %p151, %p152
    %p155 = scmp.ne.s32.totalorder %s140, %s154
    %p156 = scmp.eq.s32.totalorder %s25, 0
    %p157 = por %p155, %p156
    %s159 = sadd.s32 %s158, 1
    %p162 = scmp.eq.s32.totalorder %s19, 1
    %p163 = scmp.ne.s32.totalorder %s158, %s160
    %p164 = scmp.eq.s32.totalorder %s19, 0
    %p165 = por %p163, %p164
    %p166 = scmp.ne.s32.totalorder %s158, %s160
    %p167 = scmp.eq.s32.totalorder %s24, 1
    %p168 = por %p166, %p167
    %p169 = scmp.ne.s32.totalorder %s160, %s161
    %p170 = scmp.eq.s32.totalorder %s24, 0
    %p171 = por %p169, %p170
    %p172 = scmp.ne.s32.totalorder %s160, %s161
    %p173 = scmp.eq.s32.totalorder %s25, 1
    %p174 = por %p172, %p173
    %p176 = scmp.ne.s32.totalorder %s161, %s175
    %p177 = scmp.eq.s32.totalorder %s25, 0
    %p178 = por %p176, %p177
    %s180 = sadd.s32 %s179, 1
    %p183 = scmp.eq.s32.totalorder %s19, 1
    %p184 = scmp.ne.s32.totalorder %s179, %s181
    %p185 = scmp.eq.s32.totalorder %s19, 0
    %p186 = por %p184, %p185
    %p187 = scmp.ne.s32.totalorder %s179, %s181
    %p188 = scmp.eq.s32.totalorder %s24, 1
    %p189 = por %p187, %p188
    %p190 = scmp.ne.s32.totalorder %s181, %s182
    %p191 = scmp.eq.s32.totalorder %s24, 0
    %p192 = por %p190, %p191
    %p193 = scmp.ne.s32.totalorder %s181, %s182
    %p194 = scmp.eq.s32.totalorder %s25, 1
    %p195 = por %p193, %p194
    %p197 = scmp.ne.s32.totalorder %s182, %s196
    %p198 = scmp.eq.s32.totalorder %s25, 0
    %p199 = por %p197, %p198
    %s201 = sadd.s32 %s200, 1
    %p204 = scmp.eq.s32.totalorder %s19, 1
    %p205 = scmp.ne.s32.totalorder %s200, %s202
    %p206 = scmp.eq.s32.totalorder %s19, 0
    %p207 = por %p205, %p206
    %p208 = scmp.ne.s32.totalorder %s200, %s202
    %p209 = scmp.eq.s32.totalorder %s24, 1
    %p210 = por %p208, %p209
    %p211 = scmp.ne.s32.totalorder %s202, %s203
    %p212 = scmp.eq.s32.totalorder %s24, 0
    %p213 = por %p211, %p212
    %p214 = scmp.ne.s32.totalorder %s202, %s203
    %p215 = scmp.eq.s32.totalorder %s25, 1
    %p216 = por %p214, %p215
    %p218 = scmp.ne.s32.totalorder %s203, %s217
    %p219 = scmp.eq.s32.totalorder %s25, 0
    %p220 = por %p218, %p219
    %s222 = sadd.s32 %s221, 1
    %p225 = scmp.eq.s32.totalorder %s19, 1
    %p226 = scmp.ne.s32.totalorder %s221, %s223
    %p227 = scmp.eq.s32.totalorder %s19, 0
    %p228 = por %p226, %p227
    %p229 = scmp.ne.s32.totalorder %s221, %s223
    %p230 = scmp.eq.s32.totalorder %s24, 1
    %p231 = por %p229, %p230
    %p232 = scmp.ne.s32.totalorder %s223, %s224
    %p233 = scmp.eq.s32.totalorder %s24, 0
    %p234 = por %p232, %p233
    %p235 = scmp.ne.s32.totalorder %s223, %s224
    %p236 = scmp.eq.s32.totalorder %s25, 1
    %p237 = por %p235, %p236
    %p239 = scmp.ne.s32.totalorder %s224, %s238
    %p240 = scmp.eq.s32.totalorder %s25, 0
    %p241 = por %p239, %p240
    %s243 = sadd.s32 %s242, 1
    %p246 = scmp.eq.s32.totalorder %s19, 1
    %p247 = scmp.ne.s32.totalorder %s242, %s244
    %p248 = scmp.eq.s32.totalorder %s19, 0
    %p249 = por %p247, %p248
    %p250 = scmp.ne.s32.totalorder %s242, %s244
    %p251 = scmp.eq.s32.totalorder %s24, 1
    %p252 = por %p250, %p251
    %p253 = scmp.ne.s32.totalorder %s244, %s245
    %p254 = scmp.eq.s32.totalorder %s24, 0
    %p255 = por %p253, %p254
    %p256 = scmp.ne.s32.totalorder %s244, %s245
    %p257 = scmp.eq.s32.totalorder %s25, 1
    %p258 = por %p256, %p257
    %p260 = scmp.ne.s32.totalorder %s245, %s259
    %p261 = scmp.eq.s32.totalorder %s25, 0
    %p262 = por %p260, %p261
    %s264 = sadd.s32 %s263, 1
    %p267 = scmp.eq.s32.totalorder %s19, 1
    %p268 = scmp.ne.s32.totalorder %s263, %s265
    %p269 = scmp.eq.s32.totalorder %s19, 0
    %p270 = por %p268, %p269
    %p271 = scmp.ne.s32.totalorder %s263, %s265
    %p272 = scmp.eq.s32.totalorder %s24, 1
    %p273 = por %p271, %p272
    %p274 = scmp.ne.s32.totalorder %s265, %s266
    %p275 = scmp.eq.s32.totalorder %s24, 0
    %p276 = por %p274, %p275
    %p277 = scmp.ne.s32.totalorder %s265, %s266
    %p278 = scmp.eq.s32.totalorder %s25, 1
    %p279 = por %p277, %p278
    %p281 = scmp.ne.s32.totalorder %s266, %s280
    %p282 = scmp.eq.s32.totalorder %s25, 0
    %p283 = por %p281, %p282
    %s285 = sadd.s32 %s284, 1
    %p288 = scmp.eq.s32.totalorder %s19, 1
    %p289 = scmp.ne.s32.totalorder %s284, %s286
    %p290 = scmp.eq.s32.totalorder %s19, 0
    %p291 = por %p289, %p290
    %p292 = scmp.ne.s32.totalorder %s284, %s286
    %p293 = scmp.eq.s32.totalorder %s24, 1
    %p294 = por %p292, %p293
    %p295 = scmp.ne.s32.totalorder %s286, %s287
    %p296 = scmp.eq.s32.totalorder %s24, 0
    %p297 = por %p295, %p296
    %p298 = scmp.ne.s32.totalorder %s286, %s287
    %p299 = scmp.eq.s32.totalorder %s25, 1
    %p300 = por %p298, %p299
    %p302 = scmp.ne.s32.totalorder %s287, %s301
    %p303 = scmp.eq.s32.totalorder %s25, 0
    %p304 = por %p302, %p303
    %s305 = ssub.s32 %s19, %s26
    %p306 = scmp.eq.s32.totalorder %s305, 0
    %s308 = sadd.s32 %s307, 1
    %s309 = scalar_select %p306, %s307, %s308
    %p312 = pneg %p306
    %p313 = scmp.eq.s32.totalorder %s19, 1
    %p314 = por %p312, %p313
    %p315 = scmp.ne.s32.totalorder %s307, %s310
    %p316 = scmp.eq.s32.totalorder %s19, 0
    %p317 = por %p315, %p316
    %p318 = scmp.ne.s32.totalorder %s307, %s310
    %p319 = scmp.eq.s32.totalorder %s24, 1
    %p320 = por %p318, %p319
    %p321 = scmp.ne.s32.totalorder %s310, %s311
    %p322 = scmp.eq.s32.totalorder %s24, 0
    %p323 = por %p321, %p322
    %p324 = scmp.ne.s32.totalorder %s310, %s311
    %p325 = scmp.eq.s32.totalorder %s25, 1
    %p326 = por %p324, %p325
    %p328 = scmp.ne.s32.totalorder %s311, %s327
    %p329 = scmp.eq.s32.totalorder %s25, 0
    %p330 = por %p328, %p329
    %p331 = scmp.le.s32.totalorder 1, %s19
    %p332 = scmp.lt.s32.totalorder %s19, 3
    %p333 = pnand %p331, %p332
    %p334 = pneg %p333
    // Predicated region
    $region9: #{shroomnet_forward.1} parent=5 // pred_check
      _
    $region10: #{shroomnet_forward.1} parent=5 // pred_check_branch
      %336 = sbr.rel (%p333) target = $region12
    $region11: #{shroomnet_forward.1} parent=5 // pred_region
      %s337 = ssub.s32 %s19, 1
      // Predicated region
      $region13: #{shroomnet_forward.1} parent=11 // pred_check
        %p338 = pneg %p66
      $region14: #{shroomnet_forward.1} parent=11 // pred_check_branch
        %340 = sbr.rel (%p338) target = $region16
      $region15: #{shroomnet_forward.1} parent=11 // pred_region
        _
      $region16: #{shroomnet_forward.1} parent=11 // pred_fallthru
        _
      // Predicated region
      $region17: #{shroomnet_forward.1} parent=11 // pred_check
        %p341 = pneg %p87
      $region18: #{shroomnet_forward.1} parent=11 // pred_check_branch
        %343 = sbr.rel (%p341) target = $region20
      $region19: #{shroomnet_forward.1} parent=11 // pred_region
        _
      $region20: #{shroomnet_forward.1} parent=11 // pred_fallthru
        _
      // Predicated region
      $region21: #{shroomnet_forward.1} parent=11 // pred_check
        %p344 = pneg %p108
      $region22: #{shroomnet_forward.1} parent=11 // pred_check_branch
        %346 = sbr.rel (%p344) target = $region24
      $region23: #{shroomnet_forward.1} parent=11 // pred_region
        _
      $region24: #{shroomnet_forward.1} parent=11 // pred_fallthru
        _
      // Predicated region
      $region25: #{shroomnet_forward.1} parent=11 // pred_check
        %p347 = pneg %p129
      $region26: #{shroomnet_forward.1} parent=11 // pred_check_branch
        %349 = sbr.rel (%p347) target = $region28
      $region27: #{shroomnet_forward.1} parent=11 // pred_region
        _
      $region28: #{shroomnet_forward.1} parent=11 // pred_fallthru
        _
      // Predicated region
      $region29: #{shroomnet_forward.1} parent=11 // pred_check
        %p350 = pneg %p150
      $region30: #{shroomnet_forward.1} parent=11 // pred_check_branch
        %352 = sbr.rel (%p350) target = $region32
      $region31: #{shroomnet_forward.1} parent=11 // pred_region
        _
      $region32: #{shroomnet_forward.1} parent=11 // pred_fallthru
        _
      // Predicated region
      $region33: #{shroomnet_forward.1} parent=11 // pred_check
        %p353 = pneg %p171
      $region34: #{shroomnet_forward.1} parent=11 // pred_check_branch
        %355 = sbr.rel (%p353) target = $region36
      $region35: #{shroomnet_forward.1} parent=11 // pred_region
        _
      $region36: #{shroomnet_forward.1} parent=11 // pred_fallthru
        _
      // Predicated region
      $region37: #{shroomnet_forward.1} parent=11 // pred_check
        %p356 = pneg %p192
      $region38: #{shroomnet_forward.1} parent=11 // pred_check_branch
        %358 = sbr.rel (%p356) target = $region40
      $region39: #{shroomnet_forward.1} parent=11 // pred_region
        _
      $region40: #{shroomnet_forward.1} parent=11 // pred_fallthru
        _
      // Predicated region
      $region41: #{shroomnet_forward.1} parent=11 // pred_check
        %p359 = pneg %p213
      $region42: #{shroomnet_forward.1} parent=11 // pred_check_branch
        %361 = sbr.rel (%p359) target = $region44
      $region43: #{shroomnet_forward.1} parent=11 // pred_region
        _
      $region44: #{shroomnet_forward.1} parent=11 // pred_fallthru
        _
      // Predicated region
      $region45: #{shroomnet_forward.1} parent=11 // pred_check
        %p362 = pneg %p234
      $region46: #{shroomnet_forward.1} parent=11 // pred_check_branch
        %364 = sbr.rel (%p362) target = $region48
      $region47: #{shroomnet_forward.1} parent=11 // pred_region
        _
      $region48: #{shroomnet_forward.1} parent=11 // pred_fallthru
        _
      // Predicated region
      $region49: #{shroomnet_forward.1} parent=11 // pred_check
        %p365 = pneg %p255
      $region50: #{shroomnet_forward.1} parent=11 // pred_check_branch
        %367 = sbr.rel (%p365) target = $region52
      $region51: #{shroomnet_forward.1} parent=11 // pred_region
        _
      $region52: #{shroomnet_forward.1} parent=11 // pred_fallthru
        _
      // Predicated region
      $region53: #{shroomnet_forward.1} parent=11 // pred_check
        %p368 = pneg %p276
      $region54: #{shroomnet_forward.1} parent=11 // pred_check_branch
        %370 = sbr.rel (%p368) target = $region56
      $region55: #{shroomnet_forward.1} parent=11 // pred_region
        _
      $region56: #{shroomnet_forward.1} parent=11 // pred_fallthru
        _
      // Predicated region
      $region57: #{shroomnet_forward.1} parent=11 // pred_check
        %p371 = pneg %p297
      $region58: #{shroomnet_forward.1} parent=11 // pred_check_branch
        %373 = sbr.rel (%p371) target = $region60
      $region59: #{shroomnet_forward.1} parent=11 // pred_region
        _
      $region60: #{shroomnet_forward.1} parent=11 // pred_fallthru
        _
    $region12: #{shroomnet_forward.1} parent=5 // pred_fallthru
      _
    %p374 = scmp.lt.s32.totalorder %s19, 2
    // Predicated region
    $region61: #{shroomnet_forward.1} parent=5 // pred_check
      %p375 = pneg %p374
    $region62: #{shroomnet_forward.1} parent=5 // pred_check_branch
      %377 = sbr.rel (%p375) target = $region64
    $region63: #{shroomnet_forward.1} parent=5 // pred_region
      // Predicated region
      $region65: #{shroomnet_forward.1} parent=63 // pred_check
        %p378 = pneg %p39
      $region66: #{shroomnet_forward.1} parent=63 // pred_check_branch
        %380 = sbr.rel (%p378) target = $region68
      $region67: #{shroomnet_forward.1} parent=63 // pred_region
        %s381 = smul.u32 2, %s19
        %p382 = scmp.lt.s32.totalorder %s381, 3
        %s383 = scalar_select %p382, %s381, 3
        %s384 = smul.addr %s383, 8
        %s385 = smul.addr %s384, 4
        %s386 = scalar_lea.vmem %s0, %s385
        %s387 = smul.u32 2, %s19
      $region68: #{shroomnet_forward.1} parent=63 // pred_fallthru
        _
    $region64: #{shroomnet_forward.1} parent=5 // pred_fallthru
      _
    %p388 = scmp.le.s32.totalorder 1, %s19
    %p389 = scmp.lt.s32.totalorder %s19, 3
    %p390 = pnand %p388, %p389
    %p391 = pneg %p390
    // Predicated region
    $region69: #{shroomnet_forward.1} parent=5 // pred_check
      _
    $region70: #{shroomnet_forward.1} parent=5 // pred_check_branch
      %393 = sbr.rel (%p390) target = $region72
    $region71: #{shroomnet_forward.1} parent=5 // pred_region
      %s394 = ssub.s32 %s19, 1
      %s395 = smul.u32 2, %s24
      %p396 = scmp.lt.s32.totalorder %s395, 3
      %s397 = scalar_select %p396, %s395, 3
      %s398 = smul.addr %s397, 8
      %s399 = smul.addr %s398, 4
      %s400 = scalar_lea.vmem %s0, %s399
      %p401 = pneg %p45
      %p402 = pneg %p42
      %p403 = pneg %p66
      %p404 = pneg %p63
      %p405 = pneg %p87
      %p406 = pneg %p84
      %p407 = pneg %p108
      %p408 = pneg %p105
      %p409 = pneg %p129
      %p410 = pneg %p126
      %p411 = pneg %p150
      %p412 = pneg %p147
      %p413 = pneg %p171
      %p414 = pneg %p168
      %p415 = pneg %p192
      %p416 = pneg %p189
      %p417 = pneg %p213
      %p418 = pneg %p210
      %p419 = pneg %p234
      %p420 = pneg %p231
      %p421 = pneg %p255
      %p422 = pneg %p252
      %p423 = pneg %p276
      %p424 = pneg %p273
      %p425 = pneg %p297
      %p426 = pneg %p294
      %p427 = pneg %p323
      %p428 = pneg %p320
      %s429 = smul.u32 2, %s24
      %p430 = scmp.lt.s32.totalorder %s429, 3
      %s431 = scalar_select %p430, %s429, 3
      %s432 = scalar_lea.vmem %s13, %s431
      %s433 = smul.u32 2, %s24
      %p434 = scmp.lt.s32.totalorder %s433, 3
      %s435 = scalar_select %p434, %s433, 3
      %s436 = smul.addr %s435, 8
      %s437 = smul.addr %s436, 4
      %s438 = scalar_lea.vmem %s0, %s437
      %s439 = smul.u32 2, %s24
      %s440 = smul.u32 2, %s24
      %p441 = scmp.lt.s32.totalorder %s440, 3
      %s442 = scalar_select %p441, %s440, 3
      %s443 = scalar_lea.vmem %s13, %s442
      %s444 = smul.u32 2, %s24
      %v446 = vld [vmem:[%s438] sm:$0xf]
      %v447 = vld [vmem:[%s438 + $0x4] sm:$0xf]
      %v448 = vld [vmem:[%s438 + $0x8] sm:$0xf]
      %v449 = vld [vmem:[%s438 + $0xc] sm:$0xf]
      %v450 = vld [vmem:[%s438 + $0x10] sm:$0xf]
      %v451 = vld [vmem:[%s438 + $0x14] sm:$0xf]
      %v452 = vld [vmem:[%s438 + $0x18] sm:$0xf]
      %v453 = vld [vmem:[%s438 + $0x1c] sm:$0xf]
      %v454 = vld [vmem:[%s438 + $0x20] sm:$0xf]
      %v455 = vld [vmem:[%s438 + $0x24] sm:$0xf]
      %v456 = vld [vmem:[%s438 + $0x28] sm:$0xf]
      %v457 = vld [vmem:[%s438 + $0x2c] sm:$0xf]
      %v458 = vld [vmem:[%s438 + $0x30] sm:$0xf]
      %v459 = vld [vmem:[%s438 + $0x34] sm:$0xf]
      %v460 = vld [vmem:[%s438 + $0x38] sm:$0xf]
      %v461 = vld [vmem:[%s438 + $0x3c] sm:$0xf]
      %v462 = vld [vmem:[%s1] sm:$0xf]
      %v463 = vld [vmem:[%s1 + $0x4] sm:$0xf]
      %v464 = vld [vmem:[%s1 + $0x8] sm:$0xf]
      %v465 = vld [vmem:[%s1 + $0xc] sm:$0xf]
      %v466 = vld [vmem:[%s2] sm:$0x1]
      %v468 = vlaneseq
      %v469 = vshrl.u32 %v468, 7
      %v470 = vsub.s32 0, %v469
      %v471 = vrot.slane %v466, %v470
      %v489 = vunpack.c.l.b16 %v446
      %v490 = vunpack.c.l.b16 %v447
      %v491 = vunpack.c.l.b16 %v448
      %v492 = vunpack.c.l.b16 %v449
      %v493 = vunpack.c.l.b16 %v450
      %v494 = vunpack.c.l.b16 %v451
      %v495 = vunpack.c.l.b16 %v452
      %v496 = vunpack.c.l.b16 %v453
      %v497 = vunpack.c.l.b16 %v454
      %v498 = vunpack.c.l.b16 %v455
      %v499 = vunpack.c.l.b16 %v456
      %v500 = vunpack.c.l.b16 %v457
      %v501 = vunpack.c.l.b16 %v458
      %v502 = vunpack.c.l.b16 %v459
      %v503 = vunpack.c.l.b16 %v460
      %v504 = vunpack.c.l.b16 %v461
      %v505 = vpack.c.b16 %v490, %v489
      %v506 = vpack.c.b16 %v492, %v491
      %v507 = vpack.c.b16 %v494, %v493
      %v508 = vpack.c.b16 %v496, %v495
      %v509 = vpack.c.b16 %v498, %v497
      %v510 = vpack.c.b16 %v500, %v499
      %v511 = vpack.c.b16 %v502, %v501
      %v512 = vpack.c.b16 %v504, %v503
      %v517 = vunpack.c.l.b16 %v462
      %v518 = vunpack.c.l.b16 %v463
      %v519 = vunpack.c.l.b16 %v464
      %v520 = vunpack.c.l.b16 %v465
      %v521 = vpack.c.b16 %v518, %v517
      %v522 = vpack.c.b16 %v520, %v519
      %vm525 = vcmask 261120
      %v527 = vsel %vm525, %v505, 0
      %v530 = vsel %vm525, %v506, 0
      %v533 = vsel %vm525, %v507, 0
      %v536 = vsel %vm525, %v508, 0
      %v539 = vsel %vm525, %v509, 0
      %v542 = vsel %vm525, %v510, 0
      %v545 = vsel %vm525, %v511, 0
      %v548 = vsel %vm525, %v512, 0
      %550 = vmatprep.subr.bf16.mxu0 0
      %551 = vmatpush1.bf16.msra.mxu0 %v521
      %552 = vmatprep.subr.bf16.mxu0 0
      %553 = vmatpush1.bf16.msra.mxu0 %v522
      %554 = vmatprep.subr.bf16.mxu0 0
      %555 = vmatpush1.bf16.msra.mxu0 0
      %556 = vmatprep.subr.bf16.mxu0 0
      %557 = vmatpush1.bf16.msra.mxu0 0
      %558 = vmatprep.subr.bf16.mxu0 0
      %559 = vmatpush1.bf16.msra.mxu0 0
      %560 = vmatprep.subr.bf16.mxu0 0
      %561 = vmatpush1.bf16.msra.mxu0 0
      %562 = vmatprep.subr.bf16.mxu0 0
      %563 = vmatpush1.bf16.msra.mxu0 0
      %564 = vmatprep.subr.bf16.mxu0 0
      %565 = vmatpush1.bf16.msra.mxu0 0
      %566 = vmatprep.subr.bf16.mxu0 0
      %567 = vmatpush1.bf16.msra.mxu0 0
      %568 = vmatprep.subr.bf16.mxu0 0
      %569 = vmatpush1.bf16.msra.mxu0 0
      %570 = vmatprep.subr.bf16.mxu0 0
      %571 = vmatpush1.bf16.msra.mxu0 0
      %572 = vmatprep.subr.bf16.mxu0 0
      %573 = vmatpush1.bf16.msra.mxu0 0
      %574 = vmatprep.subr.bf16.mxu0 0
      %575 = vmatpush1.bf16.msra.mxu0 0
      %576 = vmatprep.subr.bf16.mxu0 0
      %577 = vmatpush1.bf16.msra.mxu0 0
      %578 = vmatprep.subr.bf16.mxu0 0
      %579 = vmatpush1.bf16.msra.mxu0 0
      %580 = vmatprep.subr.bf16.mxu0 0
      %581 = vmatpush1.bf16.msra.mxu0 0
      %582 = vmatprep.mubr.bf16.mxu0 0
      %583 = vmatmul.mubr.bf16.gmra.mrb[0].mxu0 %v527
      %v584 = vpop.f32.mrb[0].mxu0
      %v585 = vadd.f32 %v471, %v584
      %v586 = vpop.f32.mrb[0].mxu0
      %v587 = vpop.f32.mrb[0].mxu0
      %v588 = vadd.f32 %v471, %v587
      %v589 = vpop.f32.mrb[0].mxu0
      %590 = vmatprep.mubr.bf16.mxu0 0
      %591 = vmatmul.mubr.bf16.gmra.mrb[0].mxu0 %v530
      %v592 = vpop.f32.mrb[0].mxu0
      %v593 = vadd.f32 %v471, %v592
      %v594 = vpop.f32.mrb[0].mxu0
      %v595 = vpop.f32.mrb[0].mxu0
      %v596 = vadd.f32 %v471, %v595
      %v597 = vpop.f32.mrb[0].mxu0
      %598 = vmatprep.mubr.bf16.mxu0 0
      %599 = vmatmul.mubr.bf16.gmra.mrb[0].mxu0 %v533
      %v600 = vpop.f32.mrb[0].mxu0
      %v601 = vadd.f32 %v471, %v600
      %v602 = vpop.f32.mrb[0].mxu0
      %v603 = vpop.f32.mrb[0].mxu0
      %v604 = vadd.f32 %v471, %v603
      %v605 = vpop.f32.mrb[0].mxu0
      %606 = vmatprep.mubr.bf16.mxu0 0
      %607 = vmatmul.mubr.bf16.gmra.mrb[0].mxu0 %v536
      %v608 = vpop.f32.mrb[0].mxu0
      %v609 = vadd.f32 %v471, %v608
      %v610 = vpop.f32.mrb[0].mxu0
      %v611 = vpop.f32.mrb[0].mxu0
      %v612 = vadd.f32 %v471, %v611
      %v613 = vpop.f32.mrb[0].mxu0
      %614 = vmatprep.mubr.bf16.mxu0 0
      %615 = vmatmul.mubr.bf16.gmra.mrb[0].mxu0 %v539
      %v616 = vpop.f32.mrb[0].mxu0
      %v617 = vadd.f32 %v471, %v616
      %v618 = vpop.f32.mrb[0].mxu0
      %v619 = vpop.f32.mrb[0].mxu0
      %v620 = vadd.f32 %v471, %v619
      %v621 = vpop.f32.mrb[0].mxu0
      %622 = vmatprep.mubr.bf16.mxu0 0
      %623 = vmatmul.mubr.bf16.gmra.mrb[0].mxu0 %v542
      %v624 = vpop.f32.mrb[0].mxu0
      %v625 = vadd.f32 %v471, %v624
      %v626 = vpop.f32.mrb[0].mxu0
      %v627 = vpop.f32.mrb[0].mxu0
      %v628 = vadd.f32 %v471, %v627
      %v629 = vpop.f32.mrb[0].mxu0
      %630 = vmatprep.mubr.bf16.mxu0 0
      %631 = vmatmul.mubr.bf16.gmra.mrb[0].mxu0 %v545
      %v632 = vpop.f32.mrb[0].mxu0
      %v633 = vadd.f32 %v471, %v632
      %v634 = vpop.f32.mrb[0].mxu0
      %v635 = vpop.f32.mrb[0].mxu0
      %v636 = vadd.f32 %v471, %v635
      %v637 = vpop.f32.mrb[0].mxu0
      %638 = vmatprep.mubr.bf16.mxu0 0
      %639 = vmatmul.mubr.bf16.gmra.mrb[0].mxu0 %v548
      %v640 = vpop.f32.mrb[0].mxu0
      %v641 = vadd.f32 %v471, %v640
      %v642 = vpop.f32.mrb[0].mxu0
      %v643 = vpop.f32.mrb[0].mxu0
      %v644 = vadd.f32 %v471, %v643
      %v645 = vpop.f32.mrb[0].mxu0
      %646 = vdwg.mxu0
      %v647 = vmax.f32 %v585, 0.0
      %v648 = vmax.f32 %v588, 0.0
      %v649 = vmax.f32 %v593, 0.0
      %v650 = vmax.f32 %v596, 0.0
      %v651 = vmax.f32 %v601, 0.0
      %v652 = vmax.f32 %v604, 0.0
      %v653 = vmax.f32 %v609, 0.0
      %v654 = vmax.f32 %v612, 0.0
      %v655 = vmax.f32 %v617, 0.0
      %v656 = vmax.f32 %v620, 0.0
      %v657 = vmax.f32 %v625, 0.0
      %v658 = vmax.f32 %v628, 0.0
      %v659 = vmax.f32 %v633, 0.0
      %v660 = vmax.f32 %v636, 0.0
      %v661 = vmax.f32 %v641, 0.0
      %v662 = vmax.f32 %v644, 0.0
      %v663 = vmin.f32 %v647, 6.0
      %v664 = vmin.f32 %v648, 6.0
      %v665 = vmin.f32 %v649, 6.0
      %v666 = vmin.f32 %v650, 6.0
      %v667 = vmin.f32 %v651, 6.0
      %v668 = vmin.f32 %v652, 6.0
      %v669 = vmin.f32 %v653, 6.0
      %v670 = vmin.f32 %v654, 6.0
      %v671 = vmin.f32 %v655, 6.0
      %v672 = vmin.f32 %v656, 6.0
      %v673 = vmin.f32 %v657, 6.0
      %v674 = vmin.f32 %v658, 6.0
      %v675 = vmin.f32 %v659, 6.0
      %v676 = vmin.f32 %v660, 6.0
      %v677 = vmin.f32 %v661, 6.0
      %v678 = vmin.f32 %v662, 6.0
      %v679 = vpack.c.bf16 %v664, %v663
      %v680 = vpack.c.bf16 %v666, %v665
      %v681 = vpack.c.bf16 %v668, %v667
      %v682 = vpack.c.bf16 %v670, %v669
      %v683 = vpack.c.bf16 %v672, %v671
      %v684 = vpack.c.bf16 %v674, %v673
      %v685 = vpack.c.bf16 %v676, %v675
      %v686 = vpack.c.bf16 %v678, %v677
      %v687 = vld [vmem:[%s3] sm:$0xf]
      %v688 = vld [vmem:[%s3 + $0x4] sm:$0xf]
      %v689 = vld [vmem:[%s4] sm:$0x1]
      %v691 = vlaneseq
      %v692 = vshrl.u32 %v691, 7
      %v693 = vsub.s32 0, %v692
      %v694 = vrot.slane %v689, %v693
      %v698 = vunpack.c.l.b16 %v687
      %v699 = vunpack.c.l.b16 %v688
      %v700 = vpack.c.b16 %v699, %v698
      %vm702 = vcmask 130048
      %v704 = vsel %vm702, %v679, 0
      %v707 = vsel %vm702, %v680, 0
      %v710 = vsel %vm702, %v681, 0
      %v713 = vsel %vm702, %v682, 0
      %v716 = vsel %vm702, %v683, 0
      %v719 = vsel %vm702, %v684, 0
      %v722 = vsel %vm702, %v685, 0
      %v725 = vsel %vm702, %v686, 0
      %727 = vmatprep.subr.bf16.mxu0 0
      %728 = vmatpush1.bf16.msra.mxu0 %v700
      %729 = vmatprep.subr.bf16.mxu0 0
      %730 = vmatpush1.bf16.msra.mxu0 0
      %731 = vmatprep.subr.bf16.mxu0 0
      %732 = vmatpush1.bf16.msra.mxu0 0
      %733 = vmatprep.subr.bf16.mxu0 0
      %734 = vmatpush1.bf16.msra.mxu0 0
      %735 = vmatprep.subr.bf16.mxu0 0
      %736 = vmatpush1.bf16.msra.mxu0 0
      %737 = vmatprep.subr.bf16.mxu0 0
      %738 = vmatpush1.bf16.msra.mxu0 0
      %739 = vmatprep.subr.bf16.mxu0 0
      %740 = vmatpush1.bf16.msra.mxu0 0
      %741 = vmatprep.subr.bf16.mxu0 0
      %742 = vmatpush1.bf16.msra.mxu0 0
      %743 = vmatprep.subr.bf16.mxu0 0
      %744 = vmatpush1.bf16.msra.mxu0 0
      %745 = vmatprep.subr.bf16.mxu0 0
      %746 = vmatpush1.bf16.msra.mxu0 0
      %747 = vmatprep.subr.bf16.mxu0 0
      %748 = vmatpush1.bf16.msra.mxu0 0
      %749 = vmatprep.subr.bf16.mxu0 0
      %750 = vmatpush1.bf16.msra.mxu0 0
      %751 = vmatprep.subr.bf16.mxu0 0
      %752 = vmatpush1.bf16.msra.mxu0 0
      %753 = vmatprep.subr.bf16.mxu0 0
      %754 = vmatpush1.bf16.msra.mxu0 0
      %755 = vmatprep.subr.bf16.mxu0 0
      %756 = vmatpush1.bf16.msra.mxu0 0
      %757 = vmatprep.subr.bf16.mxu0 0
      %758 = vmatpush1.bf16.msra.mxu0 0
      %759 = vmatprep.mubr.bf16.mxu0 0
      %760 = vmatmul.mubr.bf16.gmra.mrb[0].mxu0 %v704
      %v761 = vpop.f32.mrb[0].mxu0
      %v762 = vadd.f32 %v694, %v761
      %v763 = vpop.f32.mrb[0].mxu0
      %v764 = vpop.f32.mrb[0].mxu0
      %v765 = vadd.f32 %v694, %v764
      %v766 = vpop.f32.mrb[0].mxu0
      %767 = vmatprep.mubr.bf16.mxu0 0
      %768 = vmatmul.mubr.bf16.gmra.mrb[0].mxu0 %v707
      %v769 = vpop.f32.mrb[0].mxu0
      %v770 = vadd.f32 %v694, %v769
      %v771 = vpop.f32.mrb[0].mxu0
      %v772 = vpop.f32.mrb[0].mxu0
      %v773 = vadd.f32 %v694, %v772
      %v774 = vpop.f32.mrb[0].mxu0
      %775 = vmatprep.mubr.bf16.mxu0 0
      %776 = vmatmul.mubr.bf16.gmra.mrb[0].mxu0 %v710
      %v777 = vpop.f32.mrb[0].mxu0
      %v778 = vadd.f32 %v694, %v777
      %v779 = vpop.f32.mrb[0].mxu0
      %v780 = vpop.f32.mrb[0].mxu0
      %v781 = vadd.f32 %v694, %v780
      %v782 = vpop.f32.mrb[0].mxu0
      %783 = vmatprep.mubr.bf16.mxu0 0
      %784 = vmatmul.mubr.bf16.gmra.mrb[0].mxu0 %v713
      %v785 = vpop.f32.mrb[0].mxu0
      %v786 = vadd.f32 %v694, %v785
      %v787 = vpop.f32.mrb[0].mxu0
      %v788 = vpop.f32.mrb[0].mxu0
      %v789 = vadd.f32 %v694, %v788
      %v790 = vpop.f32.mrb[0].mxu0
      %791 = vmatprep.mubr.bf16.mxu0 0
      %792 = vmatmul.mubr.bf16.gmra.mrb[0].mxu0 %v716
      %v793 = vpop.f32.mrb[0].mxu0
      %v794 = vadd.f32 %v694, %v793
      %v795 = vpop.f32.mrb[0].mxu0
      %v796 = vpop.f32.mrb[0].mxu0
      %v797 = vadd.f32 %v694, %v796
      %v798 = vpop.f32.mrb[0].mxu0
      %799 = vmatprep.mubr.bf16.mxu0 0
      %800 = vmatmul.mubr.bf16.gmra.mrb[0].mxu0 %v719
      %v801 = vpop.f32.mrb[0].mxu0
      %v802 = vadd.f32 %v694, %v801
      %v803 = vpop.f32.mrb[0].mxu0
      %v804 = vpop.f32.mrb[0].mxu0
      %v805 = vadd.f32 %v694, %v804
      %v806 = vpop.f32.mrb[0].mxu0
      %807 = vmatprep.mubr.bf16.mxu0 0
      %808 = vmatmul.mubr.bf16.gmra.mrb[0].mxu0 %v722
      %v809 = vpop.f32.mrb[0].mxu0
      %v810 = vadd.f32 %v694, %v809
      %v811 = vpop.f32.mrb[0].mxu0
      %v812 = vpop.f32.mrb[0].mxu0
      %v813 = vadd.f32 %v694, %v812
      %v814 = vpop.f32.mrb[0].mxu0
      %815 = vmatprep.mubr.bf16.mxu0 0
      %816 = vmatmul.mubr.bf16.gmra.mrb[0].mxu0 %v725
      %v817 = vpop.f32.mrb[0].mxu0
      %v818 = vadd.f32 %v694, %v817
      %v819 = vpop.f32.mrb[0].mxu0
      %v820 = vpop.f32.mrb[0].mxu0
      %v821 = vadd.f32 %v694, %v820
      %v822 = vpop.f32.mrb[0].mxu0
      %823 = vdwg.mxu0
      %v824 = vmax.f32 %v762, 0.0
      %v825 = vmax.f32 %v765, 0.0
      %v826 = vmax.f32 %v770, 0.0
      %v827 = vmax.f32 %v773, 0.0
      %v828 = vmax.f32 %v778, 0.0
      %v829 = vmax.f32 %v781, 0.0
      %v830 = vmax.f32 %v786, 0.0
      %v831 = vmax.f32 %v789, 0.0
      %v832 = vmax.f32 %v794, 0.0
      %v833 = vmax.f32 %v797, 0.0
      %v834 = vmax.f32 %v802, 0.0
      %v835 = vmax.f32 %v805, 0.0
      %v836 = vmax.f32 %v810, 0.0
      %v837 = vmax.f32 %v813, 0.0
      %v838 = vmax.f32 %v818, 0.0
      %v839 = vmax.f32 %v821, 0.0
      %v840 = vmin.f32 %v824, 6.0
      %v841 = vmin.f32 %v825, 6.0
      %v842 = vmin.f32 %v826, 6.0
      %v843 = vmin.f32 %v827, 6.0
      %v844 = vmin.f32 %v828, 6.0
      %v845 = vmin.f32 %v829, 6.0
      %v846 = vmin.f32 %v830, 6.0
      %v847 = vmin.f32 %v831, 6.0
      %v848 = vmin.f32 %v832, 6.0
      %v849 = vmin.f32 %v833, 6.0
      %v850 = vmin.f32 %v834, 6.0
      %v851 = vmin.f32 %v835, 6.0
      %v852 = vmin.f32 %v836, 6.0
      %v853 = vmin.f32 %v837, 6.0
      %v854 = vmin.f32 %v838, 6.0
      %v855 = vmin.f32 %v839, 6.0
      %856 = vst [vmem:[#allocation2] sm:$0xff] 0.0
      %857 = vst [vmem:[#allocation2 + $0x8] sm:$0x3] 0.0
      %858 = vst [vmem:[#allocation2 + $0xa0] sm:$0xff] 0.0
      %859 = vst [vmem:[#allocation2 + $0xa8] sm:$0x3] 0.0
      %s860 = scalar_lea.vmem [#allocation2], 144
      %861 = vst [vmem:[%s860] sm:$0xff] 0.0
      %862 = vst [vmem:[%s860 + $0x8] sm:$0x3] 0.0
      %863 = vst [vmem:[%s860 + $0xa0] sm:$0xff] 0.0
      %864 = vst [vmem:[%s860 + $0xa8] sm:$0x3] 0.0
      %s865 = scalar_lea.vmem [#allocation2], 16
      %866 = vst [vmem:[%s865] sm:$0x1] 0.0
      %867 = vst [vmem:[%s865 + $0x10] sm:$0x1] 0.0
      %868 = vst [vmem:[%s865 + $0x20] sm:$0x1] 0.0
      %869 = vst [vmem:[%s865 + $0x30] sm:$0x1] 0.0
      %870 = vst [vmem:[%s865 + $0x40] sm:$0x1] 0.0
      %871 = vst [vmem:[%s865 + $0x50] sm:$0x1] 0.0
      %872 = vst [vmem:[%s865 + $0x60] sm:$0x1] 0.0
      %873 = vst [vmem:[%s865 + $0x70] sm:$0x1] 0.0
      %874 = vst [vmem:[%s865 + $0xa0] sm:$0x1] 0.0
      %875 = vst [vmem:[%s865 + $0xb0] sm:$0x1] 0.0
      %876 = vst [vmem:[%s865 + $0xc0] sm:$0x1] 0.0
      %877 = vst [vmem:[%s865 + $0xd0] sm:$0x1] 0.0
      %878 = vst [vmem:[%s865 + $0xe0] sm:$0x1] 0.0
      %879 = vst [vmem:[%s865 + $0xf0] sm:$0x1] 0.0
      %880 = vst [vmem:[%s865 + $0x100] sm:$0x1] 0.0
      %881 = vst [vmem:[%s865 + $0x110] sm:$0x1] 0.0
      %882 = vst [vmem:[%s865 + $0x9] sm:$0x1] 0.0
      %883 = vst [vmem:[%s865 + $0x19] sm:$0x1] 0.0
      %884 = vst [vmem:[%s865 + $0x29] sm:$0x1] 0.0
      %885 = vst [vmem:[%s865 + $0x39] sm:$0x1] 0.0
      %886 = vst [vmem:[%s865 + $0x49] sm:$0x1] 0.0
      %887 = vst [vmem:[%s865 + $0x59] sm:$0x1] 0.0
      %888 = vst [vmem:[%s865 + $0x69] sm:$0x1] 0.0
      %889 = vst [vmem:[%s865 + $0x79] sm:$0x1] 0.0
      %890 = vst [vmem:[%s865 + $0xa9] sm:$0x1] 0.0
      %891 = vst [vmem:[%s865 + $0xb9] sm:$0x1] 0.0
      %892 = vst [vmem:[%s865 + $0xc9] sm:$0x1] 0.0
      %893 = vst [vmem:[%s865 + $0xd9] sm:$0x1] 0.0
      %894 = vst [vmem:[%s865 + $0xe9] sm:$0x1] 0.0
      %895 = vst [vmem:[%s865 + $0xf9] sm:$0x1] 0.0
      %896 = vst [vmem:[%s865 + $0x109] sm:$0x1] 0.0
      %897 = vst [vmem:[%s865 + $0x119] sm:$0x1] 0.0
      %898 = vst [vmem:[%s865 + $0x1] sm:$0xff] %v840
      %899 = vst [vmem:[%s865 + $0x11] sm:$0xff] %v841
      %900 = vst [vmem:[%s865 + $0x21] sm:$0xff] %v842
      %901 = vst [vmem:[%s865 + $0x31] sm:$0xff] %v843
      %902 = vst [vmem:[%s865 + $0x41] sm:$0xff] %v844
      %903 = vst [vmem:[%s865 + $0x51] sm:$0xff] %v845
      %904 = vst [vmem:[%s865 + $0x61] sm:$0xff] %v846
      %905 = vst [vmem:[%s865 + $0x71] sm:$0xff] %v847
      %906 = vst [vmem:[%s865 + $0xa1] sm:$0xff] %v848
      %907 = vst [vmem:[%s865 + $0xb1] sm:$0xff] %v849
      %908 = vst [vmem:[%s865 + $0xc1] sm:$0xff] %v850
      %909 = vst [vmem:[%s865 + $0xd1] sm:$0xff] %v851
      %910 = vst [vmem:[%s865 + $0xe1] sm:$0xff] %v852
      %911 = vst [vmem:[%s865 + $0xf1] sm:$0xff] %v853
      %912 = vst [vmem:[%s865 + $0x101] sm:$0xff] %v854
      %913 = vst [vmem:[%s865 + $0x111] sm:$0xff] %v855
      %v914 = vld [vmem:[%s5] sm:$0x7]
      %v915 = vld [vmem:[%s5 + $0x4] sm:$0x7]
      %v916 = vld [vmem:[%s5 + $0x8] sm:$0x7]
      %v917 = vld [vmem:[#allocation2] sm:$0xff]
      %v918 = vld [vmem:[#allocation2 + $0x10] sm:$0xff]
      %v919 = vld [vmem:[#allocation2 + $0x20] sm:$0xff]
      %v920 = vld [vmem:[#allocation2 + $0x30] sm:$0xff]
      %v921 = vld [vmem:[#allocation2 + $0x40] sm:$0xff]
      %v922 = vld [vmem:[#allocation2 + $0x50] sm:$0xff]
      %v923 = vld [vmem:[#allocation2 + $0x60] sm:$0xff]
      %v924 = vld [vmem:[#allocation2 + $0x70] sm:$0xff]
      %v925 = vld [vmem:[#allocation2 + $0xa0] sm:$0xff]
      %v926 = vld [vmem:[#allocation2 + $0xb0] sm:$0xff]
      %v927 = vld [vmem:[#allocation2 + $0xc0] sm:$0xff]
      %v928 = vld [vmem:[#allocation2 + $0xd0] sm:$0xff]
      %v929 = vld [vmem:[#allocation2 + $0xe0] sm:$0xff]
      %v930 = vld [vmem:[#allocation2 + $0xf0] sm:$0xff]
      %v931 = vld [vmem:[#allocation2 + $0x100] sm:$0xff]
      %v932 = vld [vmem:[#allocation2 + $0x110] sm:$0xff]
      %v933 = vlaneseq
      %v934 = vshrl.u32 %v933, 7
      %v935 = vsub.s32 0, %v934
      %v936 = vrot.slane %v914, %v935
      %v937 = vmul.f32 %v917, %v936
      %v938 = vmul.f32 %v918, %v936
      %v939 = vmul.f32 %v919, %v936
      %v940 = vmul.f32 %v920, %v936
      %v941 = vmul.f32 %v921, %v936
      %v942 = vmul.f32 %v922, %v936
      %v943 = vmul.f32 %v923, %v936
      %v944 = vmul.f32 %v924, %v936
      %v945 = vmul.f32 %v925, %v936
      %v946 = vmul.f32 %v926, %v936
      %v947 = vmul.f32 %v927, %v936
      %v948 = vmul.f32 %v928, %v936
      %v949 = vmul.f32 %v929, %v936
      %v950 = vmul.f32 %v930, %v936
      %v951 = vmul.f32 %v931, %v936
      %v952 = vmul.f32 %v932, %v936
      %v953 = vadd.f32 %v937, 0.0
      %v954 = vadd.f32 %v938, 0.0
      %v955 = vadd.f32 %v939, 0.0
      %v956 = vadd.f32 %v940, 0.0
      %v957 = vadd.f32 %v941, 0.0
      %v958 = vadd.f32 %v942, 0.0
      %v959 = vadd.f32 %v943, 0.0
      %v960 = vadd.f32 %v944, 0.0
      %v961 = vadd.f32 %v945, 0.0
      %v962 = vadd.f32 %v946, 0.0
      %v963 = vadd.f32 %v947, 0.0
      %v964 = vadd.f32 %v948, 0.0
      %v965 = vadd.f32 %v949, 0.0
      %v966 = vadd.f32 %v950, 0.0
      %v967 = vadd.f32 %v951, 0.0
      %v968 = vadd.f32 %v952, 0.0
      %v969 = vld [vmem:[#allocation2 + $0x1] sm:$0xff]
      %v970 = vld [vmem:[#allocation2 + $0x11] sm:$0xff]
      %v971 = vld [vmem:[#allocation2 + $0x21] sm:$0xff]
      %v972 = vld [vmem:[#allocation2 + $0x31] sm:$0xff]
      %v973 = vld [vmem:[#allocation2 + $0x41] sm:$0xff]
      %v974 = vld [vmem:[#allocation2 + $0x51] sm:$0xff]
      %v975 = vld [vmem:[#allocation2 + $0x61] sm:$0xff]
      %v976 = vld [vmem:[#allocation2 + $0x71] sm:$0xff]
      %v977 = vld [vmem:[#allocation2 + $0xa1] sm:$0xff]
      %v978 = vld [vmem:[#allocation2 + $0xb1] sm:$0xff]
      %v979 = vld [vmem:[#allocation2 + $0xc1] sm:$0xff]
      %v980 = vld [vmem:[#allocation2 + $0xd1] sm:$0xff]
      %v981 = vld [vmem:[#allocation2 + $0xe1] sm:$0xff]
      %v982 = vld [vmem:[#allocation2 + $0xf1] sm:$0xff]
      %v983 = vld [vmem:[#allocation2 + $0x101] sm:$0xff]
      %v984 = vld [vmem:[#allocation2 + $0x111] sm:$0xff]
      %v985 = vlaneseq
      %v986 = vshrl.u32 %v985, 7
      %v987 = vsub.s32 1, %v986
      %v988 = vrot.slane %v914, %v987
      %v989 = vmul.f32 %v969, %v988
      %v990 = vmul.f32 %v970, %v988
      %v991 = vmul.f32 %v971, %v988
      %v992 = vmul.f32 %v972, %v988
      %v993 = vmul.f32 %v973, %v988
      %v994 = vmul.f32 %v974, %v988
      %v995 = vmul.f32 %v975, %v988
      %v996 = vmul.f32 %v976, %v988
      %v997 = vmul.f32 %v977, %v988
      %v998 = vmul.f32 %v978, %v988
      %v999 = vmul.f32 %v979, %v988
      %v1000 = vmul.f32 %v980, %v988
      %v1001 = vmul.f32 %v981, %v988
      %v1002 = vmul.f32 %v982, %v988
      %v1003 = vmul.f32 %v983, %v988
      %v1004 = vmul.f32 %v984, %v988
      %v1005 = vadd.f32 %v953, %v989
      %v1006 = vadd.f32 %v954, %v990
      %v1007 = vadd.f32 %v955, %v991
      %v1008 = vadd.f32 %v956, %v992
      %v1009 = vadd.f32 %v957, %v993
      %v1010 = vadd.f32 %v958, %v994
      %v1011 = vadd.f32 %v959, %v995
      %v1012 = vadd.f32 %v960, %v996
      %v1013 = vadd.f32 %v961, %v997
      %v1014 = vadd.f32 %v962, %v998
      %v1015 = vadd.f32 %v963, %v999
      %v1016 = vadd.f32 %v964, %v1000
      %v1017 = vadd.f32 %v965, %v1001
      %v1018 = vadd.f32 %v966, %v1002
      %v1019 = vadd.f32 %v967, %v1003
      %v1020 = vadd.f32 %v968, %v1004
      %v1021 = vld [vmem:[#allocation2 + $0x2] sm:$0xff]
      %v1022 = vld [vmem:[#allocation2 + $0x12] sm:$0xff]
      %v1023 = vld [vmem:[#allocation2 + $0x22] sm:$0xff]
      %v1024 = vld [vmem:[#allocation2 + $0x32] sm:$0xff]
      %v1025 = vld [vmem:[#allocation2 + $0x42] sm:$0xff]
      %v1026 = vld [vmem:[#allocation2 + $0x52] sm:$0xff]
      %v1027 = vld [vmem:[#allocation2 + $0x62] sm:$0xff]
      %v1028 = vld [vmem:[#allocation2 + $0x72] sm:$0xff]
      %v1029 = vld [vmem:[#allocation2 + $0xa2] sm:$0xff]
      %v1030 = vld [vmem:[#allocation2 + $0xb2] sm:$0xff]
      %v1031 = vld [vmem:[#allocation2 + $0xc2] sm:$0xff]
      %v1032 = vld [vmem:[#allocation2 + $0xd2] sm:$0xff]
      %v1033 = vld [vmem:[#allocation2 + $0xe2] sm:$0xff]
      %v1034 = vld [vmem:[#allocation2 + $0xf2] sm:$0xff]
      %v1035 = vld [vmem:[#allocation2 + $0x102] sm:$0xff]
      %v1036 = vld [vmem:[#allocation2 + $0x112] sm:$0xff]
      %v1037 = vlaneseq
      %v1038 = vshrl.u32 %v1037, 7
      %v1039 = vsub.s32 2, %v1038
      %v1040 = vrot.slane %v914, %v1039
      %v1041 = vmul.f32 %v1021, %v1040
      %v1042 = vmul.f32 %v1022, %v1040
      %v1043 = vmul.f32 %v1023, %v1040
      %v1044 = vmul.f32 %v1024, %v1040
      %v1045 = vmul.f32 %v1025, %v1040
      %v1046 = vmul.f32 %v1026, %v1040
      %v1047 = vmul.f32 %v1027, %v1040
      %v1048 = vmul.f32 %v1028, %v1040
      %v1049 = vmul.f32 %v1029, %v1040
      %v1050 = vmul.f32 %v1030, %v1040
      %v1051 = vmul.f32 %v1031, %v1040
      %v1052 = vmul.f32 %v1032, %v1040
      %v1053 = vmul.f32 %v1033, %v1040
      %v1054 = vmul.f32 %v1034, %v1040
      %v1055 = vmul.f32 %v1035, %v1040
      %v1056 = vmul.f32 %v1036, %v1040
      %v1057 = vadd.f32 %v1005, %v1041
      %v1058 = vadd.f32 %v1006, %v1042
      %v1059 = vadd.f32 %v1007, %v1043
      %v1060 = vadd.f32 %v1008, %v1044
      %v1061 = vadd.f32 %v1009, %v1045
      %v1062 = vadd.f32 %v1010, %v1046
      %v1063 = vadd.f32 %v1011, %v1047
      %v1064 = vadd.f32 %v1012, %v1048
      %v1065 = vadd.f32 %v1013, %v1049
      %v1066 = vadd.f32 %v1014, %v1050
      %v1067 = vadd.f32 %v1015, %v1051
      %v1068 = vadd.f32 %v1016, %v1052
      %v1069 = vadd.f32 %v1017, %v1053
      %v1070 = vadd.f32 %v1018, %v1054
      %v1071 = vadd.f32 %v1019, %v1055
      %v1072 = vadd.f32 %v1020, %v1056
      %v1073 = vld [vmem:[%s865] sm:$0xff]
      %v1074 = vld [vmem:[%s865 + $0x10] sm:$0xff]
      %v1075 = vld [vmem:[%s865 + $0x20] sm:$0xff]
      %v1076 = vld [vmem:[%s865 + $0x30] sm:$0xff]
      %v1077 = vld [vmem:[%s865 + $0x40] sm:$0xff]
      %v1078 = vld [vmem:[%s865 + $0x50] sm:$0xff]
      %v1079 = vld [vmem:[%s865 + $0x60] sm:$0xff]
      %v1080 = vld [vmem:[%s865 + $0x70] sm:$0xff]
      %v1081 = vld [vmem:[%s865 + $0xa0] sm:$0xff]
      %v1082 = vld [vmem:[%s865 + $0xb0] sm:$0xff]
      %v1083 = vld [vmem:[%s865 + $0xc0] sm:$0xff]
      %v1084 = vld [vmem:[%s865 + $0xd0] sm:$0xff]
      %v1085 = vld [vmem:[%s865 + $0xe0] sm:$0xff]
      %v1086 = vld [vmem:[%s865 + $0xf0] sm:$0xff]
      %v1087 = vld [vmem:[%s865 + $0x100] sm:$0xff]
      %v1088 = vld [vmem:[%s865 + $0x110] sm:$0xff]
      %v1089 = vlaneseq
      %v1090 = vshrl.u32 %v1089, 7
      %v1091 = vsub.s32 0, %v1090
      %v1092 = vrot.slane %v915, %v1091
      %v1093 = vmul.f32 %v1073, %v1092
      %v1094 = vmul.f32 %v1074, %v1092
      %v1095 = vmul.f32 %v1075, %v1092
      %v1096 = vmul.f32 %v1076, %v1092
      %v1097 = vmul.f32 %v1077, %v1092
      %v1098 = vmul.f32 %v1078, %v1092
      %v1099 = vmul.f32 %v1079, %v1092
      %v1100 = vmul.f32 %v1080, %v1092
      %v1101 = vmul.f32 %v1081, %v1092
      %v1102 = vmul.f32 %v1082, %v1092
      %v1103 = vmul.f32 %v1083, %v1092
      %v1104 = vmul.f32 %v1084, %v1092
      %v1105 = vmul.f32 %v1085, %v1092
      %v1106 = vmul.f32 %v1086, %v1092
      %v1107 = vmul.f32 %v1087, %v1092
      %v1108 = vmul.f32 %v1088, %v1092
      %v1109 = vadd.f32 %v1057, %v1093
      %v1110 = vadd.f32 %v1058, %v1094
      %v1111 = vadd.f32 %v1059, %v1095
      %v1112 = vadd.f32 %v1060, %v1096
      %v1113 = vadd.f32 %v1061, %v1097
      %v1114 = vadd.f32 %v1062, %v1098
      %v1115 = vadd.f32 %v1063, %v1099
      %v1116 = vadd.f32 %v1064, %v1100
      %v1117 = vadd.f32 %v1065, %v1101
      %v1118 = vadd.f32 %v1066, %v1102
      %v1119 = vadd.f32 %v1067, %v1103
      %v1120 = vadd.f32 %v1068, %v1104
      %v1121 = vadd.f32 %v1069, %v1105
      %v1122 = vadd.f32 %v1070, %v1106
      %v1123 = vadd.f32 %v1071, %v1107
      %v1124 = vadd.f32 %v1072, %v1108
      %v1125 = vld [vmem:[%s865 + $0x1] sm:$0xff]
      %v1126 = vld [vmem:[%s865 + $0x11] sm:$0xff]
      %v1127 = vld [vmem:[%s865 + $0x21] sm:$0xff]
      %v1128 = vld [vmem:[%s865 + $0x31] sm:$0xff]
      %v1129 = vld [vmem:[%s865 + $0x41] sm:$0xff]
      %v1130 = vld [vmem:[%s865 + $0x51] sm:$0xff]
      %v1131 = vld [vmem:[%s865 + $0x61] sm:$0xff]
      %v1132 = vld [vmem:[%s865 + $0x71] sm:$0xff]
      %v1133 = vld [vmem:[%s865 + $0xa1] sm:$0xff]
      %v1134 = vld [vmem:[%s865 + $0xb1] sm:$0xff]
      %v1135 = vld [vmem:[%s865 + $0xc1] sm:$0xff]
      %v1136 = vld [vmem:[%s865 + $0xd1] sm:$0xff]
      %v1137 = vld [vmem:[%s865 + $0xe1] sm:$0xff]
      %v1138 = vld [vmem:[%s865 + $0xf1] sm:$0xff]
      %v1139 = vld [vmem:[%s865 + $0x101] sm:$0xff]
      %v1140 = vld [vmem:[%s865 + $0x111] sm:$0xff]
      %v1141 = vlaneseq
      %v1142 = vshrl.u32 %v1141, 7
      %v1143 = vsub.s32 1, %v1142
      %v1144 = vrot.slane %v915, %v1143
      %v1145 = vmul.f32 %v1125, %v1144
      %v1146 = vmul.f32 %v1126, %v1144
      %v1147 = vmul.f32 %v1127, %v1144
      %v1148 = vmul.f32 %v1128, %v1144
      %v1149 = vmul.f32 %v1129, %v1144
      %v1150 = vmul.f32 %v1130, %v1144
      %v1151 = vmul.f32 %v1131, %v1144
      %v1152 = vmul.f32 %v1132, %v1144
      %v1153 = vmul.f32 %v1133, %v1144
      %v1154 = vmul.f32 %v1134, %v1144
      %v1155 = vmul.f32 %v1135, %v1144
      %v1156 = vmul.f32 %v1136, %v1144
      %v1157 = vmul.f32 %v1137, %v1144
      %v1158 = vmul.f32 %v1138, %v1144
      %v1159 = vmul.f32 %v1139, %v1144
      %v1160 = vmul.f32 %v1140, %v1144
      %v1161 = vadd.f32 %v1109, %v1145
      %v1162 = vadd.f32 %v1110, %v1146
      %v1163 = vadd.f32 %v1111, %v1147
      %v1164 = vadd.f32 %v1112, %v1148
      %v1165 = vadd.f32 %v1113, %v1149
      %v1166 = vadd.f32 %v1114, %v1150
      %v1167 = vadd.f32 %v1115, %v1151
      %v1168 = vadd.f32 %v1116, %v1152
      %v1169 = vadd.f32 %v1117, %v1153
      %v1170 = vadd.f32 %v1118, %v1154
      %v1171 = vadd.f32 %v1119, %v1155
      %v1172 = vadd.f32 %v1120, %v1156
      %v1173 = vadd.f32 %v1121, %v1157
      %v1174 = vadd.f32 %v1122, %v1158
      %v1175 = vadd.f32 %v1123, %v1159
      %v1176 = vadd.f32 %v1124, %v1160
      %v1177 = vld [vmem:[%s865 + $0x2] sm:$0xff]
      %v1178 = vld [vmem:[%s865 + $0x12] sm:$0xff]
      %v1179 = vld [vmem:[%s865 + $0x22] sm:$0xff]
      %v1180 = vld [vmem:[%s865 + $0x32] sm:$0xff]
      %v1181 = vld [vmem:[%s865 + $0x42] sm:$0xff]
      %v1182 = vld [vmem:[%s865 + $0x52] sm:$0xff]
      %v1183 = vld [vmem:[%s865 + $0x62] sm:$0xff]
      %v1184 = vld [vmem:[%s865 + $0x72] sm:$0xff]
      %v1185 = vld [vmem:[%s865 + $0xa2] sm:$0xff]
      %v1186 = vld [vmem:[%s865 + $0xb2] sm:$0xff]
      %v1187 = vld [vmem:[%s865 + $0xc2] sm:$0xff]
      %v1188 = vld [vmem:[%s865 + $0xd2] sm:$0xff]
      %v1189 = vld [vmem:[%s865 + $0xe2] sm:$0xff]
      %v1190 = vld [vmem:[%s865 + $0xf2] sm:$0xff]
      %v1191 = vld [vmem:[%s865 + $0x102] sm:$0xff]
      %v1192 = vld [vmem:[%s865 + $0x112] sm:$0xff]
      %v1193 = vlaneseq
      %v1194 = vshrl.u32 %v1193, 7
      %v1195 = vsub.s32 2, %v1194
      %v1196 = vrot.slane %v915, %v1195
      %v1197 = vmul.f32 %v1177, %v1196
      %v1198 = vmul.f32 %v1178, %v1196
      %v1199 = vmul.f32 %v1179, %v1196
      %v1200 = vmul.f32 %v1180, %v1196
      %v1201 = vmul.f32 %v1181, %v1196
      %v1202 = vmul.f32 %v1182, %v1196
      %v1203 = vmul.f32 %v1183, %v1196
      %v1204 = vmul.f32 %v1184, %v1196
      %v1205 = vmul.f32 %v1185, %v1196
      %v1206 = vmul.f32 %v1186, %v1196
      %v1207 = vmul.f32 %v1187, %v1196
      %v1208 = vmul.f32 %v1188, %v1196
      %v1209 = vmul.f32 %v1189, %v1196
      %v1210 = vmul.f32 %v1190, %v1196
      %v1211 = vmul.f32 %v1191, %v1196
      %v1212 = vmul.f32 %v1192, %v1196
      %v1213 = vadd.f32 %v1161, %v1197
      %v1214 = vadd.f32 %v1162, %v1198
      %v1215 = vadd.f32 %v1163, %v1199
      %v1216 = vadd.f32 %v1164, %v1200
      %v1217 = vadd.f32 %v1165, %v1201
      %v1218 = vadd.f32 %v1166, %v1202
      %v1219 = vadd.f32 %v1167, %v1203
      %v1220 = vadd.f32 %v1168, %v1204
      %v1221 = vadd.f32 %v1169, %v1205
      %v1222 = vadd.f32 %v1170, %v1206
      %v1223 = vadd.f32 %v1171, %v1207
      %v1224 = vadd.f32 %v1172, %v1208
      %v1225 = vadd.f32 %v1173, %v1209
      %v1226 = vadd.f32 %v1174, %v1210
      %v1227 = vadd.f32 %v1175, %v1211
      %v1228 = vadd.f32 %v1176, %v1212
      %s1229 = scalar_lea.vmem [#allocation2], 32
      %v1230 = vld [vmem:[%s1229] sm:$0xff]
      %v1231 = vld [vmem:[%s1229 + $0x10] sm:$0xff]
      %v1232 = vld [vmem:[%s1229 + $0x20] sm:$0xff]
      %v1233 = vld [vmem:[%s1229 + $0x30] sm:$0xff]
      %v1234 = vld [vmem:[%s1229 + $0x40] sm:$0xff]
      %v1235 = vld [vmem:[%s1229 + $0x50] sm:$0xff]
      %v1236 = vld [vmem:[%s1229 + $0x60] sm:$0xff]
      %v1237 = vld [vmem:[%s1229 + $0x70] sm:$0xff]
      %v1238 = vld [vmem:[%s1229 + $0xa0] sm:$0xff]
      %v1239 = vld [vmem:[%s1229 + $0xb0] sm:$0xff]
      %v1240 = vld [vmem:[%s1229 + $0xc0] sm:$0xff]
      %v1241 = vld [vmem:[%s1229 + $0xd0] sm:$0xff]
      %v1242 = vld [vmem:[%s1229 + $0xe0] sm:$0xff]
      %v1243 = vld [vmem:[%s1229 + $0xf0] sm:$0xff]
      %v1244 = vld [vmem:[%s1229 + $0x100] sm:$0xff]
      %v1245 = vld [vmem:[%s1229 + $0x110] sm:$0xff]
      %v1246 = vlaneseq
      %v1247 = vshrl.u32 %v1246, 7
      %v1248 = vsub.s32 0, %v1247
      %v1249 = vrot.slane %v916, %v1248
      %v1250 = vmul.f32 %v1230, %v1249
      %v1251 = vmul.f32 %v1231, %v1249
      %v1252 = vmul.f32 %v1232, %v1249
      %v1253 = vmul.f32 %v1233, %v1249
      %v1254 = vmul.f32 %v1234, %v1249
      %v1255 = vmul.f32 %v1235, %v1249
      %v1256 = vmul.f32 %v1236, %v1249
      %v1257 = vmul.f32 %v1237, %v1249
      %v1258 = vmul.f32 %v1238, %v1249
      %v1259 = vmul.f32 %v1239, %v1249
      %v1260 = vmul.f32 %v1240, %v1249
      %v1261 = vmul.f32 %v1241, %v1249
      %v1262 = vmul.f32 %v1242, %v1249
      %v1263 = vmul.f32 %v1243, %v1249
      %v1264 = vmul.f32 %v1244, %v1249
      %v1265 = vmul.f32 %v1245, %v1249
      %v1266 = vadd.f32 %v1213, %v1250
      %v1267 = vadd.f32 %v1214, %v1251
      %v1268 = vadd.f32 %v1215, %v1252
      %v1269 = vadd.f32 %v1216, %v1253
      %v1270 = vadd.f32 %v1217, %v1254
      %v1271 = vadd.f32 %v1218, %v1255
      %v1272 = vadd.f32 %v1219, %v1256
      %v1273 = vadd.f32 %v1220, %v1257
      %v1274 = vadd.f32 %v1221, %v1258
      %v1275 = vadd.f32 %v1222, %v1259
      %v1276 = vadd.f32 %v1223, %v1260
      %v1277 = vadd.f32 %v1224, %v1261
      %v1278 = vadd.f32 %v1225, %v1262
      %v1279 = vadd.f32 %v1226, %v1263
      %v1280 = vadd.f32 %v1227, %v1264
      %v1281 = vadd.f32 %v1228, %v1265
      %v1282 = vld [vmem:[%s1229 + $0x1] sm:$0xff]
      %v1283 = vld [vmem:[%s1229 + $0x11] sm:$0xff]
      %v1284 = vld [vmem:[%s1229 + $0x21] sm:$0xff]
      %v1285 = vld [vmem:[%s1229 + $0x31] sm:$0xff]
      %v1286 = vld [vmem:[%s1229 + $0x41] sm:$0xff]
      %v1287 = vld [vmem:[%s1229 + $0x51] sm:$0xff]
      %v1288 = vld [vmem:[%s1229 + $0x61] sm:$0xff]
      %v1289 = vld [vmem:[%s1229 + $0x71] sm:$0xff]
      %v1290 = vld [vmem:[%s1229 + $0xa1] sm:$0xff]
      %v1291 = vld [vmem:[%s1229 + $0xb1] sm:$0xff]
      %v1292 = vld [vmem:[%s1229 + $0xc1] sm:$0xff]
      %v1293 = vld [vmem:[%s1229 + $0xd1] sm:$0xff]
      %v1294 = vld [vmem:[%s1229 + $0xe1] sm:$0xff]
      %v1295 = vld [vmem:[%s1229 + $0xf1] sm:$0xff]
      %v1296 = vld [vmem:[%s1229 + $0x101] sm:$0xff]
      %v1297 = vld [vmem:[%s1229 + $0x111] sm:$0xff]
      %v1298 = vlaneseq
      %v1299 = vshrl.u32 %v1298, 7
      %v1300 = vsub.s32 1, %v1299
      %v1301 = vrot.slane %v916, %v1300
      %v1302 = vmul.f32 %v1282, %v1301
      %v1303 = vmul.f32 %v1283, %v1301
      %v1304 = vmul.f32 %v1284, %v1301
      %v1305 = vmul.f32 %v1285, %v1301
      %v1306 = vmul.f32 %v1286, %v1301
      %v1307 = vmul.f32 %v1287, %v1301
      %v1308 = vmul.f32 %v1288, %v1301
      %v1309 = vmul.f32 %v1289, %v1301
      %v1310 = vmul.f32 %v1290, %v1301
      %v1311 = vmul.f32 %v1291, %v1301
      %v1312 = vmul.f32 %v1292, %v1301
      %v1313 = vmul.f32 %v1293, %v1301
      %v1314 = vmul.f32 %v1294, %v1301
      %v1315 = vmul.f32 %v1295, %v1301
      %v1316 = vmul.f32 %v1296, %v1301
      %v1317 = vmul.f32 %v1297, %v1301
      %v1318 = vadd.f32 %v1266, %v1302
      %v1319 = vadd.f32 %v1267, %v1303
      %v1320 = vadd.f32 %v1268, %v1304
      %v1321 = vadd.f32 %v1269, %v1305
      %v1322 = vadd.f32 %v1270, %v1306
      %v1323 = vadd.f32 %v1271, %v1307
      %v1324 = vadd.f32 %v1272, %v1308
      %v1325 = vadd.f32 %v1273, %v1309
      %v1326 = vadd.f32 %v1274, %v1310
      %v1327 = vadd.f32 %v1275, %v1311
      %v1328 = vadd.f32 %v1276, %v1312
      %v1329 = vadd.f32 %v1277, %v1313
      %v1330 = vadd.f32 %v1278, %v1314
      %v1331 = vadd.f32 %v1279, %v1315
      %v1332 = vadd.f32 %v1280, %v1316
      %v1333 = vadd.f32 %v1281, %v1317
      %v1334 = vld [vmem:[%s1229 + $0x2] sm:$0xff]
      %v1335 = vld [vmem:[%s1229 + $0x12] sm:$0xff]
      %v1336 = vld [vmem:[%s1229 + $0x22] sm:$0xff]
      %v1337 = vld [vmem:[%s1229 + $0x32] sm:$0xff]
      %v1338 = vld [vmem:[%s1229 + $0x42] sm:$0xff]
      %v1339 = vld [vmem:[%s1229 + $0x52] sm:$0xff]
      %v1340 = vld [vmem:[%s1229 + $0x62] sm:$0xff]
      %v1341 = vld [vmem:[%s1229 + $0x72] sm:$0xff]
      %v1342 = vld [vmem:[%s1229 + $0xa2] sm:$0xff]
      %v1343 = vld [vmem:[%s1229 + $0xb2] sm:$0xff]
      %v1344 = vld [vmem:[%s1229 + $0xc2] sm:$0xff]
      %v1345 = vld [vmem:[%s1229 + $0xd2] sm:$0xff]
      %v1346 = vld [vmem:[%s1229 + $0xe2] sm:$0xff]
      %v1347 = vld [vmem:[%s1229 + $0xf2] sm:$0xff]
      %v1348 = vld [vmem:[%s1229 + $0x102] sm:$0xff]
      %v1349 = vld [vmem:[%s1229 + $0x112] sm:$0xff]
      %v1350 = vlaneseq
      %v1351 = vshrl.u32 %v1350, 7
      %v1352 = vsub.s32 2, %v1351
      %v1353 = vrot.slane %v916, %v1352
      %v1354 = vmul.f32 %v1334, %v1353
      %v1355 = vmul.f32 %v1335, %v1353
      %v1356 = vmul.f32 %v1336, %v1353
      %v1357 = vmul.f32 %v1337, %v1353
      %v1358 = vmul.f32 %v1338, %v1353
      %v1359 = vmul.f32 %v1339, %v1353
      %v1360 = vmul.f32 %v1340, %v1353
      %v1361 = vmul.f32 %v1341, %v1353
      %v1362 = vmul.f32 %v1342, %v1353
      %v1363 = vmul.f32 %v1343, %v1353
      %v1364 = vmul.f32 %v1344, %v1353
      %v1365 = vmul.f32 %v1345, %v1353
      %v1366 = vmul.f32 %v1346, %v1353
      %v1367 = vmul.f32 %v1347, %v1353
      %v1368 = vmul.f32 %v1348, %v1353
      %v1369 = vmul.f32 %v1349, %v1353
      %v1370 = vadd.f32 %v1318, %v1354
      %v1371 = vadd.f32 %v1319, %v1355
      %v1372 = vadd.f32 %v1320, %v1356
      %v1373 = vadd.f32 %v1321, %v1357
      %v1374 = vadd.f32 %v1322, %v1358
      %v1375 = vadd.f32 %v1323, %v1359
      %v1376 = vadd.f32 %v1324, %v1360
      %v1377 = vadd.f32 %v1325, %v1361
      %v1378 = vadd.f32 %v1326, %v1362
      %v1379 = vadd.f32 %v1327, %v1363
      %v1380 = vadd.f32 %v1328, %v1364
      %v1381 = vadd.f32 %v1329, %v1365
      %v1382 = vadd.f32 %v1330, %v1366
      %v1383 = vadd.f32 %v1331, %v1367
      %v1384 = vadd.f32 %v1332, %v1368
      %v1385 = vadd.f32 %v1333, %v1369
      %v1386 = vld [vmem:[%s6] sm:$0x1]
      %v1388 = vlaneseq
      %v1389 = vshrl.u32 %v1388, 7
      %v1390 = vsub.s32 0, %v1389
      %v1391 = vrot.slane %v1386, %v1390
      %v1393 = vadd.f32 %v1370, %v1391
      %v1394 = vadd.f32 %v1371, %v1391
      %v1395 = vadd.f32 %v1372, %v1391
      %v1396 = vadd.f32 %v1373, %v1391
      %v1397 = vadd.f32 %v1374, %v1391
      %v1398 = vadd.f32 %v1375, %v1391
      %v1399 = vadd.f32 %v1376, %v1391
      %v1400 = vadd.f32 %v1377, %v1391
      %v1401 = vadd.f32 %v1378, %v1391
      %v1402 = vadd.f32 %v1379, %v1391
      %v1403 = vadd.f32 %v1380, %v1391
      %v1404 = vadd.f32 %v1381, %v1391
      %v1405 = vadd.f32 %v1382, %v1391
      %v1406 = vadd.f32 %v1383, %v1391
      %v1407 = vadd.f32 %v1384, %v1391
      %v1408 = vadd.f32 %v1385, %v1391
      %v1409 = vmax.f32 %v1393, 0.0
      %v1410 = vmax.f32 %v1394, 0.0
      %v1411 = vmax.f32 %v1395, 0.0
      %v1412 = vmax.f32 %v1396, 0.0
      %v1413 = vmax.f32 %v1397, 0.0
      %v1414 = vmax.f32 %v1398, 0.0
      %v1415 = vmax.f32 %v1399, 0.0
      %v1416 = vmax.f32 %v1400, 0.0
      %v1417 = vmax.f32 %v1401, 0.0
      %v1418 = vmax.f32 %v1402, 0.0
      %v1419 = vmax.f32 %v1403, 0.0
      %v1420 = vmax.f32 %v1404, 0.0
      %v1421 = vmax.f32 %v1405, 0.0
      %v1422 = vmax.f32 %v1406, 0.0
      %v1423 = vmax.f32 %v1407, 0.0
      %v1424 = vmax.f32 %v1408, 0.0
      %v1425 = vmin.f32 %v1409, 6.0
      %v1426 = vmin.f32 %v1410, 6.0
      %v1427 = vmin.f32 %v1411, 6.0
      %v1428 = vmin.f32 %v1412, 6.0
      %v1429 = vmin.f32 %v1413, 6.0
      %v1430 = vmin.f32 %v1414, 6.0
      %v1431 = vmin.f32 %v1415, 6.0
      %v1432 = vmin.f32 %v1416, 6.0
      %v1433 = vmin.f32 %v1417, 6.0
      %v1434 = vmin.f32 %v1418, 6.0
      %v1435 = vmin.f32 %v1419, 6.0
      %v1436 = vmin.f32 %v1420, 6.0
      %v1437 = vmin.f32 %v1421, 6.0
      %v1438 = vmin.f32 %v1422, 6.0
      %v1439 = vmin.f32 %v1423, 6.0
      %v1440 = vmin.f32 %v1424, 6.0
      %v1441 = vpack.c.bf16 %v1426, %v1425
      %v1442 = vpack.c.bf16 %v1428, %v1427
      %v1443 = vpack.c.bf16 %v1430, %v1429
      %v1444 = vpack.c.bf16 %v1432, %v1431
      %v1445 = vpack.c.bf16 %v1434, %v1433
      %v1446 = vpack.c.bf16 %v1436, %v1435
      %v1447 = vpack.c.bf16 %v1438, %v1437
      %v1448 = vpack.c.bf16 %v1440, %v1439
      %v1449 = vld [vmem:[%s7] sm:$0xf]
      %v1450 = vld [vmem:[%s7 + $0x4] sm:$0xf]
      %v1451 = vld [vmem:[%s7 + $0x8] sm:$0xf]
      %v1452 = vld [vmem:[%s7 + $0xc] sm:$0xf]
      %v1453 = vld [vmem:[%s7 + $0x10] sm:$0xf]
      %v1454 = vld [vmem:[%s7 + $0x14] sm:$0xf]
      %v1455 = vld [vmem:[%s7 + $0x18] sm:$0xf]
      %v1456 = vld [vmem:[%s7 + $0x1c] sm:$0xf]
      %v1457 = vld [vmem:[%s7 + $0x20] sm:$0xf]
      %v1458 = vld [vmem:[%s7 + $0x24] sm:$0xf]
      %v1459 = vld [vmem:[%s7 + $0x28] sm:$0xf]
      %v1460 = vld [vmem:[%s7 + $0x2c] sm:$0xf]
      %v1461 = vld [vmem:[%s7 + $0x30] sm:$0xf]
      %v1462 = vld [vmem:[%s7 + $0x34] sm:$0xf]
      %v1463 = vld [vmem:[%s7 + $0x38] sm:$0xf]
      %v1464 = vld [vmem:[%s7 + $0x3c] sm:$0xf]
      %v1465 = vld [vmem:[%s8] sm:$0x1]
      %v1467 = vlaneseq
      %v1468 = vshrl.u32 %v1467, 7
      %v1469 = vsub.s32 0, %v1468
      %v1470 = vrot.slane %v1465, %v1469
      %v1488 = vunpack.c.l.b16 %v1449
      %v1489 = vunpack.c.l.b16 %v1450
      %v1490 = vunpack.c.l.b16 %v1451
      %v1491 = vunpack.c.l.b16 %v1452
      %v1492 = vunpack.c.l.b16 %v1453
      %v1493 = vunpack.c.l.b16 %v1454
      %v1494 = vunpack.c.l.b16 %v1455
      %v1495 = vunpack.c.l.b16 %v1456
      %v1496 = vunpack.c.l.b16 %v1457
      %v1497 = vunpack.c.l.b16 %v1458
      %v1498 = vunpack.c.l.b16 %v1459
      %v1499 = vunpack.c.l.b16 %v1460
      %v1500 = vunpack.c.l.b16 %v1461
      %v1501 = vunpack.c.l.b16 %v1462
      %v1502 = vunpack.c.l.b16 %v1463
      %v1503 = vunpack.c.l.b16 %v1464
      %v1504 = vpack.c.b16 %v1489, %v1488
      %v1505 = vpack.c.b16 %v1491, %v1490
      %v1506 = vpack.c.b16 %v1493, %v1492
      %v1507 = vpack.c.b16 %v1495, %v1494
      %v1508 = vpack.c.b16 %v1497, %v1496
      %v1509 = vpack.c.b16 %v1499, %v1498
      %v1510 = vpack.c.b16 %v1501, %v1500
      %v1511 = vpack.c.b16 %v1503, %v1502
      %1520 = vmatprep.subr.bf16.mxu0 0
      %1521 = vmatpush1.bf16.msra.mxu0 %v1504
      %1522 = vmatprep.subr.bf16.mxu0 0
      %1523 = vmatpush1.bf16.msra.mxu0 %v1505
      %1524 = vmatprep.subr.bf16.mxu0 0
      %1525 = vmatpush1.bf16.msra.mxu0 %v1506
      %1526 = vmatprep.subr.bf16.mxu0 0
      %1527 = vmatpush1.bf16.msra.mxu0 %v1507
      %1528 = vmatprep.subr.bf16.mxu0 0
      %1529 = vmatpush1.bf16.msra.mxu0 %v1508
      %1530 = vmatprep.subr.bf16.mxu0 0
      %1531 = vmatpush1.bf16.msra.mxu0 %v1509
      %1532 = vmatprep.subr.bf16.mxu0 0
      %1533 = vmatpush1.bf16.msra.mxu0 %v1510
      %1534 = vmatprep.subr.bf16.mxu0 0
      %1535 = vmatpush1.bf16.msra.mxu0 %v1511
      %1536 = vmatprep.subr.bf16.mxu0 0
      %1537 = vmatpush1.bf16.msra.mxu0 0
      %1538 = vmatprep.subr.bf16.mxu0 0
      %1539 = vmatpush1.bf16.msra.mxu0 0
      %1540 = vmatprep.subr.bf16.mxu0 0
      %1541 = vmatpush1.bf16.msra.mxu0 0
      %1542 = vmatprep.subr.bf16.mxu0 0
      %1543 = vmatpush1.bf16.msra.mxu0 0
      %1544 = vmatprep.subr.bf16.mxu0 0
      %1545 = vmatpush1.bf16.msra.mxu0 0
      %1546 = vmatprep.subr.bf16.mxu0 0
      %1547 = vmatpush1.bf16.msra.mxu0 0
      %1548 = vmatprep.subr.bf16.mxu0 0
      %1549 = vmatpush1.bf16.msra.mxu0 0
      %1550 = vmatprep.subr.bf16.mxu0 0
      %1551 = vmatpush1.bf16.msra.mxu0 0
      %1552 = vmatprep.mubr.bf16.mxu0 0
      %1553 = vmatmul.mubr.bf16.gmra.mrb[0].mxu0 %v1441
      %v1554 = vpop.f32.mrb[0].mxu0
      %v1555 = vadd.f32 %v1470, %v1554
      %v1556 = vpop.f32.mrb[0].mxu0
      %v1557 = vpop.f32.mrb[0].mxu0
      %v1558 = vadd.f32 %v1470, %v1557
      %v1559 = vpop.f32.mrb[0].mxu0
      %1560 = vmatprep.mubr.bf16.mxu0 0
      %1561 = vmatmul.mubr.bf16.gmra.mrb[0].mxu0 %v1442
      %v1562 = vpop.f32.mrb[0].mxu0
      %v1563 = vadd.f32 %v1470, %v1562
      %v1564 = vpop.f32.mrb[0].mxu0
      %v1565 = vpop.f32.mrb[0].mxu0
      %v1566 = vadd.f32 %v1470, %v1565
      %v1567 = vpop.f32.mrb[0].mxu0
      %1568 = vmatprep.mubr.bf16.mxu0 0
      %1569 = vmatmul.mubr.bf16.gmra.mrb[0].mxu0 %v1443
      %v1570 = vpop.f32.mrb[0].mxu0
      %v1571 = vadd.f32 %v1470, %v1570
      %v1572 = vpop.f32.mrb[0].mxu0
      %v1573 = vpop.f32.mrb[0].mxu0
      %v1574 = vadd.f32 %v1470, %v1573
      %v1575 = vpop.f32.mrb[0].mxu0
      %1576 = vmatprep.mubr.bf16.mxu0 0
      %1577 = vmatmul.mubr.bf16.gmra.mrb[0].mxu0 %v1444
      %v1578 = vpop.f32.mrb[0].mxu0
      %v1579 = vadd.f32 %v1470, %v1578
      %v1580 = vpop.f32.mrb[0].mxu0
      %v1581 = vpop.f32.mrb[0].mxu0
      %v1582 = vadd.f32 %v1470, %v1581
      %v1583 = vpop.f32.mrb[0].mxu0
      %1584 = vmatprep.mubr.bf16.mxu0 0
      %1585 = vmatmul.mubr.bf16.gmra.mrb[0].mxu0 %v1445
      %v1586 = vpop.f32.mrb[0].mxu0
      %v1587 = vadd.f32 %v1470, %v1586
      %v1588 = vpop.f32.mrb[0].mxu0
      %v1589 = vpop.f32.mrb[0].mxu0
      %v1590 = vadd.f32 %v1470, %v1589
      %v1591 = vpop.f32.mrb[0].mxu0
      %1592 = vmatprep.mubr.bf16.mxu0 0
      %1593 = vmatmul.mubr.bf16.gmra.mrb[0].mxu0 %v1446
      %v1594 = vpop.f32.mrb[0].mxu0
      %v1595 = vadd.f32 %v1470, %v1594
      %v1596 = vpop.f32.mrb[0].mxu0
      %v1597 = vpop.f32.mrb[0].mxu0
      %v1598 = vadd.f32 %v1470, %v1597
      %v1599 = vpop.f32.mrb[0].mxu0
      %1600 = vmatprep.mubr.bf16.mxu0 0
      %1601 = vmatmul.mubr.bf16.gmra.mrb[0].mxu0 %v1447
      %v1602 = vpop.f32.mrb[0].mxu0
      %v1603 = vadd.f32 %v1470, %v1602
      %v1604 = vpop.f32.mrb[0].mxu0
      %v1605 = vpop.f32.mrb[0].mxu0
      %v1606 = vadd.f32 %v1470, %v1605
      %v1607 = vpop.f32.mrb[0].mxu0
      %1608 = vmatprep.mubr.bf16.mxu0 0
      %1609 = vmatmul.mubr.bf16.gmra.mrb[0].mxu0 %v1448
      %v1610 = vpop.f32.mrb[0].mxu0
      %v1611 = vadd.f32 %v1470, %v1610
      %v1612 = vpop.f32.mrb[0].mxu0
      %v1613 = vpop.f32.mrb[0].mxu0
      %v1614 = vadd.f32 %v1470, %v1613
      %v1615 = vpop.f32.mrb[0].mxu0
      %1616 = vdwg.mxu0
      %v1617 = vpack.c.bf16 %v1558, %v1555
      %v1618 = vpack.c.bf16 %v1566, %v1563
      %v1619 = vpack.c.bf16 %v1574, %v1571
      %v1620 = vpack.c.bf16 %v1582, %v1579
      %v1621 = vpack.c.bf16 %v1590, %v1587
      %v1622 = vpack.c.bf16 %v1598, %v1595
      %v1623 = vpack.c.bf16 %v1606, %v1603
      %v1624 = vpack.c.bf16 %v1614, %v1611
      %v1625 = vld [vmem:[%s9] sm:$0xf]
      %v1626 = vld [vmem:[%s9 + $0x4] sm:$0xf]
      %v1627 = vld [vmem:[%s9 + $0x8] sm:$0xf]
      %v1628 = vld [vmem:[%s9 + $0xc] sm:$0xf]
      %v1629 = vld [vmem:[%s10] sm:$0x1]
      %v1631 = vlaneseq
      %v1632 = vshrl.u32 %v1631, 7
      %v1633 = vsub.s32 0, %v1632
      %v1634 = vrot.slane %v1629, %v1633
      %v1640 = vunpack.c.l.b16 %v1625
      %v1641 = vunpack.c.l.b16 %v1626
      %v1642 = vunpack.c.l.b16 %v1627
      %v1643 = vunpack.c.l.b16 %v1628
      %v1644 = vpack.c.b16 %v1641, %v1640
      %v1645 = vpack.c.b16 %v1643, %v1642
      %v1649 = vsel %vm525, %v1617, 0
      %v1652 = vsel %vm525, %v1618, 0
      %v1655 = vsel %vm525, %v1619, 0
      %v1658 = vsel %vm525, %v1620, 0
      %v1661 = vsel %vm525, %v1621, 0
      %v1664 = vsel %vm525, %v1622, 0
      %v1667 = vsel %vm525, %v1623, 0
      %v1670 = vsel %vm525, %v1624, 0
      %1672 = vmatprep.subr.bf16.mxu0 0
      %1673 = vmatpush1.bf16.msra.mxu0 %v1644
      %1674 = vmatprep.subr.bf16.mxu0 0
      %1675 = vmatpush1.bf16.msra.mxu0 %v1645
      %1676 = vmatprep.subr.bf16.mxu0 0
      %1677 = vmatpush1.bf16.msra.mxu0 0
      %1678 = vmatprep.subr.bf16.mxu0 0
      %1679 = vmatpush1.bf16.msra.mxu0 0
      %1680 = vmatprep.subr.bf16.mxu0 0
      %1681 = vmatpush1.bf16.msra.mxu0 0
      %1682 = vmatprep.subr.bf16.mxu0 0
      %1683 = vmatpush1.bf16.msra.mxu0 0
      %1684 = vmatprep.subr.bf16.mxu0 0
      %1685 = vmatpush1.bf16.msra.mxu0 0
      %1686 = vmatprep.subr.bf16.mxu0 0
      %1687 = vmatpush1.bf16.msra.mxu0 0
      %1688 = vmatprep.subr.bf16.mxu0 0
      %1689 = vmatpush1.bf16.msra.mxu0 0
      %1690 = vmatprep.subr.bf16.mxu0 0
      %1691 = vmatpush1.bf16.msra.mxu0 0
      %1692 = vmatprep.subr.bf16.mxu0 0
      %1693 = vmatpush1.bf16.msra.mxu0 0
      %1694 = vmatprep.subr.bf16.mxu0 0
      %1695 = vmatpush1.bf16.msra.mxu0 0
      %1696 = vmatprep.subr.bf16.mxu0 0
      %1697 = vmatpush1.bf16.msra.mxu0 0
      %1698 = vmatprep.subr.bf16.mxu0 0
      %1699 = vmatpush1.bf16.msra.mxu0 0
      %1700 = vmatprep.subr.bf16.mxu0 0
      %1701 = vmatpush1.bf16.msra.mxu0 0
      %1702 = vmatprep.subr.bf16.mxu0 0
      %1703 = vmatpush1.bf16.msra.mxu0 0
      %1704 = vmatprep.mubr.bf16.mxu0 0
      %1705 = vmatmul.mubr.bf16.gmra.mrb[0].mxu0 %v1649
      %v1706 = vpop.f32.mrb[0].mxu0
      %v1707 = vadd.f32 %v1634, %v1706
      %v1708 = vpop.f32.mrb[0].mxu0
      %v1709 = vpop.f32.mrb[0].mxu0
      %v1710 = vadd.f32 %v1634, %v1709
      %v1711 = vpop.f32.mrb[0].mxu0
      %1712 = vmatprep.mubr.bf16.mxu0 0
      %1713 = vmatmul.mubr.bf16.gmra.mrb[0].mxu0 %v1652
      %v1714 = vpop.f32.mrb[0].mxu0
      %v1715 = vadd.f32 %v1634, %v1714
      %v1716 = vpop.f32.mrb[0].mxu0
      %v1717 = vpop.f32.mrb[0].mxu0
      %v1718 = vadd.f32 %v1634, %v1717
      %v1719 = vpop.f32.mrb[0].mxu0
      %1720 = vmatprep.mubr.bf16.mxu0 0
      %1721 = vmatmul.mubr.bf16.gmra.mrb[0].mxu0 %v1655
      %v1722 = vpop.f32.mrb[0].mxu0
      %v1723 = vadd.f32 %v1634, %v1722
      %v1724 = vpop.f32.mrb[0].mxu0
      %v1725 = vpop.f32.mrb[0].mxu0
      %v1726 = vadd.f32 %v1634, %v1725
      %v1727 = vpop.f32.mrb[0].mxu0
      %1728 = vmatprep.mubr.bf16.mxu0 0
      %1729 = vmatmul.mubr.bf16.gmra.mrb[0].mxu0 %v1658
      %v1730 = vpop.f32.mrb[0].mxu0
      %v1731 = vadd.f32 %v1634, %v1730
      %v1732 = vpop.f32.mrb[0].mxu0
      %v1733 = vpop.f32.mrb[0].mxu0
      %v1734 = vadd.f32 %v1634, %v1733
      %v1735 = vpop.f32.mrb[0].mxu0
      %1736 = vmatprep.mubr.bf16.mxu0 0
      %1737 = vmatmul.mubr.bf16.gmra.mrb[0].mxu0 %v1661
      %v1738 = vpop.f32.mrb[0].mxu0
      %v1739 = vadd.f32 %v1634, %v1738
      %v1740 = vpop.f32.mrb[0].mxu0
      %v1741 = vpop.f32.mrb[0].mxu0
      %v1742 = vadd.f32 %v1634, %v1741
      %v1743 = vpop.f32.mrb[0].mxu0
      %1744 = vmatprep.mubr.bf16.mxu0 0
      %1745 = vmatmul.mubr.bf16.gmra.mrb[0].mxu0 %v1664
      %v1746 = vpop.f32.mrb[0].mxu0
      %v1747 = vadd.f32 %v1634, %v1746
      %v1748 = vpop.f32.mrb[0].mxu0
      %v1749 = vpop.f32.mrb[0].mxu0
      %v1750 = vadd.f32 %v1634, %v1749
      %v1751 = vpop.f32.mrb[0].mxu0
      %1752 = vmatprep.mubr.bf16.mxu0 0
      %1753 = vmatmul.mubr.bf16.gmra.mrb[0].mxu0 %v1667
      %v1754 = vpop.f32.mrb[0].mxu0
      %v1755 = vadd.f32 %v1634, %v1754
      %v1756 = vpop.f32.mrb[0].mxu0
      %v1757 = vpop.f32.mrb[0].mxu0
      %v1758 = vadd.f32 %v1634, %v1757
      %v1759 = vpop.f32.mrb[0].mxu0
      %1760 = vmatprep.mubr.bf16.mxu0 0
      %1761 = vmatmul.mubr.bf16.gmra.mrb[0].mxu0 %v1670
      %v1762 = vpop.f32.mrb[0].mxu0
      %v1763 = vadd.f32 %v1634, %v1762
      %v1764 = vpop.f32.mrb[0].mxu0
      %v1765 = vpop.f32.mrb[0].mxu0
      %v1766 = vadd.f32 %v1634, %v1765
      %v1767 = vpop.f32.mrb[0].mxu0
      %1768 = vdwg.mxu0
      %v1769 = vmax.f32 %v1707, 0.0
      %v1770 = vmax.f32 %v1710, 0.0
      %v1771 = vmax.f32 %v1715, 0.0
      %v1772 = vmax.f32 %v1718, 0.0
      %v1773 = vmax.f32 %v1723, 0.0
      %v1774 = vmax.f32 %v1726, 0.0
      %v1775 = vmax.f32 %v1731, 0.0
      %v1776 = vmax.f32 %v1734, 0.0
      %v1777 = vmax.f32 %v1739, 0.0
      %v1778 = vmax.f32 %v1742, 0.0
      %v1779 = vmax.f32 %v1747, 0.0
      %v1780 = vmax.f32 %v1750, 0.0
      %v1781 = vmax.f32 %v1755, 0.0
      %v1782 = vmax.f32 %v1758, 0.0
      %v1783 = vmax.f32 %v1763, 0.0
      %v1784 = vmax.f32 %v1766, 0.0
      %v1785 = vmin.f32 %v1769, 6.0
      %v1786 = vmin.f32 %v1770, 6.0
      %v1787 = vmin.f32 %v1771, 6.0
      %v1788 = vmin.f32 %v1772, 6.0
      %v1789 = vmin.f32 %v1773, 6.0
      %v1790 = vmin.f32 %v1774, 6.0
      %v1791 = vmin.f32 %v1775, 6.0
      %v1792 = vmin.f32 %v1776, 6.0
      %v1793 = vmin.f32 %v1777, 6.0
      %v1794 = vmin.f32 %v1778, 6.0
      %v1795 = vmin.f32 %v1779, 6.0
      %v1796 = vmin.f32 %v1780, 6.0
      %v1797 = vmin.f32 %v1781, 6.0
      %v1798 = vmin.f32 %v1782, 6.0
      %v1799 = vmin.f32 %v1783, 6.0
      %v1800 = vmin.f32 %v1784, 6.0
      %vm1801 = vcmask 523264
      %v1802 = vsel %vm1801, %v1785, 0.0
      %v1803 = vsel %vm1801, %v1786, 0.0
      %v1804 = vadd.f32 %v1802, %v1803
      %v1805 = vsel %vm1801, %v1787, 0.0
      %v1806 = vadd.f32 %v1804, %v1805
      %v1807 = vsel %vm1801, %v1788, 0.0
      %v1808 = vadd.f32 %v1806, %v1807
      %v1809 = vsel %vm1801, %v1789, 0.0
      %v1810 = vadd.f32 %v1808, %v1809
      %v1811 = vsel %vm1801, %v1790, 0.0
      %v1812 = vadd.f32 %v1810, %v1811
      %v1813 = vsel %vm1801, %v1791, 0.0
      %v1814 = vadd.f32 %v1812, %v1813
      %v1815 = vsel %vm1801, %v1792, 0.0
      %v1816 = vadd.f32 %v1814, %v1815
      %v1817 = vrot.slane %v1816, 4
      %v1818 = vadd.f32 %v1816, %v1817
      %v1819 = vrot.slane %v1818, 2
      %v1820 = vadd.f32 %v1818, %v1819
      %v1821 = vrot.slane %v1820, 1
      %v1822 = vadd.f32 %v1820, %v1821
      %v1823 = vsel %vm1801, %v1793, 0.0
      %v1824 = vsel %vm1801, %v1794, 0.0
      %v1825 = vadd.f32 %v1823, %v1824
      %v1826 = vsel %vm1801, %v1795, 0.0
      %v1827 = vadd.f32 %v1825, %v1826
      %v1828 = vsel %vm1801, %v1796, 0.0
      %v1829 = vadd.f32 %v1827, %v1828
      %v1830 = vsel %vm1801, %v1797, 0.0
      %v1831 = vadd.f32 %v1829, %v1830
      %v1832 = vsel %vm1801, %v1798, 0.0
      %v1833 = vadd.f32 %v1831, %v1832
      %v1834 = vsel %vm1801, %v1799, 0.0
      %v1835 = vadd.f32 %v1833, %v1834
      %v1836 = vsel %vm1801, %v1800, 0.0
      %v1837 = vadd.f32 %v1835, %v1836
      %v1838 = vrot.slane %v1837, 4
      %v1839 = vadd.f32 %v1837, %v1838
      %v1840 = vrot.slane %v1839, 2
      %v1841 = vadd.f32 %v1839, %v1840
      %v1842 = vrot.slane %v1841, 1
      %v1843 = vadd.f32 %v1841, %v1842
      %v1844 = vrcp.pop 64.0
      %v1845 = vmul.f32 %v1822, %v1844
      %v1846 = vmul.f32 %v1843, %v1844
      %v1847 = vpack.c.bf16 %v1845, %v1845
      %v1848 = vpack.c.bf16 %v1846, %v1846
      %v1849 = vld [vmem:[%s11] sm:$0xf]
      %v1850 = vld [vmem:[%s11 + $0x4] sm:$0xf]
      %v1851 = vld [vmem:[%s11 + $0x8] sm:$0xf]
      %v1852 = vld [vmem:[%s11 + $0xc] sm:$0xf]
      %v1853 = vld [vmem:[%s11 + $0x10] sm:$0xf]
      %v1854 = vld [vmem:[%s11 + $0x14] sm:$0xf]
      %v1855 = vld [vmem:[%s11 + $0x18] sm:$0xf]
      %v1856 = vld [vmem:[%s11 + $0x1c] sm:$0xf]
      %v1857 = vld [vmem:[%s12] sm:$0x1]
      %v1859 = vlaneseq
      %v1860 = vshrl.u32 %v1859, 7
      %v1861 = vsub.s32 0, %v1860
      %v1862 = vrot.slane %v1857, %v1861
      %v1866 = vunpack.c.l.b16 %v1847
      %v1867 = vunpack.c.l.b16 %v1848
      %vm1868 = vcmask 1041409
      %v1869 = vsel %vm1868, %v1867, %v1866
      %v1870 = vpack.c.b16 %v1869, %v1869
      %v1879 = vunpack.c.l.b16 %v1849
      %v1880 = vunpack.c.l.b16 %v1850
      %v1881 = vunpack.c.l.b16 %v1851
      %v1882 = vunpack.c.l.b16 %v1852
      %v1883 = vunpack.c.l.b16 %v1853
      %v1884 = vunpack.c.l.b16 %v1854
      %v1885 = vunpack.c.l.b16 %v1855
      %v1886 = vunpack.c.l.b16 %v1856
      %v1887 = vpack.c.b16 %v1880, %v1879
      %v1888 = vpack.c.b16 %v1882, %v1881
      %v1889 = vpack.c.b16 %v1884, %v1883
      %v1890 = vpack.c.b16 %v1886, %v1885
      %v1896 = vsel %vm1801, %v1870, 0
      %1898 = vmatprep.subr.bf16.mxu0 0
      %1899 = vmatpush1.bf16.msra.mxu0 %v1887
      %1900 = vmatprep.subr.bf16.mxu0 0
      %1901 = vmatpush1.bf16.msra.mxu0 %v1888
      %1902 = vmatprep.subr.bf16.mxu0 0
      %1903 = vmatpush1.bf16.msra.mxu0 %v1889
      %1904 = vmatprep.subr.bf16.mxu0 0
      %1905 = vmatpush1.bf16.msra.mxu0 %v1890
      %1906 = vmatprep.subr.bf16.mxu0 0
      %1907 = vmatpush1.bf16.msra.mxu0 0
      %1908 = vmatprep.subr.bf16.mxu0 0
      %1909 = vmatpush1.bf16.msra.mxu0 0
      %1910 = vmatprep.subr.bf16.mxu0 0
      %1911 = vmatpush1.bf16.msra.mxu0 0
      %1912 = vmatprep.subr.bf16.mxu0 0
      %1913 = vmatpush1.bf16.msra.mxu0 0
      %1914 = vmatprep.subr.bf16.mxu0 0
      %1915 = vmatpush1.bf16.msra.mxu0 0
      %1916 = vmatprep.subr.bf16.mxu0 0
      %1917 = vmatpush1.bf16.msra.mxu0 0
      %1918 = vmatprep.subr.bf16.mxu0 0
      %1919 = vmatpush1.bf16.msra.mxu0 0
      %1920 = vmatprep.subr.bf16.mxu0 0
      %1921 = vmatpush1.bf16.msra.mxu0 0
      %1922 = vmatprep.subr.bf16.mxu0 0
      %1923 = vmatpush1.bf16.msra.mxu0 0
      %1924 = vmatprep.subr.bf16.mxu0 0
      %1925 = vmatpush1.bf16.msra.mxu0 0
      %1926 = vmatprep.subr.bf16.mxu0 0
      %1927 = vmatpush1.bf16.msra.mxu0 0
      %1928 = vmatprep.subr.bf16.mxu0 0
      %1929 = vmatpush1.bf16.msra.mxu0 0
      %1930 = vmatprep.mubr.bf16.mxu0 0
      %1931 = vmatmul.mubr.bf16.gmra.mrb[0].mxu0 %v1896
      %v1932 = vpop.f32.mrb[0].mxu0
      %v1933 = vadd.f32 %v1862, %v1932
      %v1934 = vpop.f32.mrb[0].mxu0
      %v1935 = vpop.f32.mrb[0].mxu0
      %v1936 = vpop.f32.mrb[0].mxu0
      %1937 = vdwg.mxu0
      %v1940 = vunpack.c.l.s4 1966171168
      %v1941 = vunpack.c.0.s8 %v1940
      %v1942 = vlaneseq
      %v1943 = vshrl.u32 %v1942, 7
      %v1944 = vsub.s32 %v1941, %v1943
      %v1945 = vrot.slane %v1933, %v1944
      %v1946 = vcombine.high %v1945, %v1945
      %v1948 = vunpack.c.l.s4 1966171168
      %v1949 = vunpack.c.0.s8 %v1948
      %v1950 = vlaneseq
      %v1951 = vshrl.u32 %v1950, 7
      %v1952 = vsub.s32 %v1949, %v1951
      %v1953 = vrot.slane %v1945, %v1952
      %v1955 = vunpack.c.l.s4 1966171168
      %v1956 = vunpack.c.0.s8 %v1955
      %v1957 = vlaneseq
      %v1958 = vshrl.u32 %v1957, 7
      %v1959 = vsub.s32 %v1956, %v1958
      %v1960 = vrot.slane %v1946, %v1959
      %1963 = vst [vmem:[%s443] sm:$0x1] %v1953
      %1964 = vst [vmem:[%s443 + $0x1] sm:$0x1] %v1960
      %s1965 = smul.u32 2, %s24
      %p1966 = scmp.lt.s32.totalorder %s1965, 3
      %s1967 = scalar_select %p1966, %s1965, 3
      %s1968 = scalar_lea.vmem %s13, %s1967
      // Predicated region
      $region73: #{shroomnet_forward.1} parent=71 // pred_check
        %p1969 = pneg %p320
      $region74: #{shroomnet_forward.1} parent=71 // pred_check_branch
        %1971 = sbr.rel (%p1969) target = $region76
      $region75: #{shroomnet_forward.1} parent=71 // pred_region
        %s1972 = smul.u32 2, %s24
      $region76: #{shroomnet_forward.1} parent=71 // pred_fallthru
        _
    $region72: #{shroomnet_forward.1} parent=5 // pred_fallthru
      _
    %p1973 = scmp.le.s32.totalorder 2, %s19
    // Predicated region
    $region77: #{shroomnet_forward.1} parent=5 // pred_check
      %p1974 = pneg %p1973
    $region78: #{shroomnet_forward.1} parent=5 // pred_check_branch
      %1976 = sbr.rel (%p1974) target = $region80
    $region79: #{shroomnet_forward.1} parent=5 // pred_region
      %s1977 = ssub.s32 %s19, 2
      // Predicated region
      $region81: #{shroomnet_forward.1} parent=79 // pred_check
        %p1978 = pneg %p326
      $region82: #{shroomnet_forward.1} parent=79 // pred_check_branch
        %1980 = sbr.rel (%p1978) target = $region84
      $region83: #{shroomnet_forward.1} parent=79 // pred_region
        %s1981 = smul.u32 2, %s25
        %p1982 = scmp.lt.s32.totalorder %s1981, 3
        %s1983 = scalar_select %p1982, %s1981, 3
        %s1984 = scalar_lea.vmem %s13, %s1983
      $region84: #{shroomnet_forward.1} parent=79 // pred_fallthru
        _
    $region80: #{shroomnet_forward.1} parent=5 // pred_fallthru
      _
  $region6: #{shroomnet_forward.1} parent=0 // loop_footer
    %s23 = sadd.s32 1, %s19
  $region7: #{shroomnet_forward.1} parent=0 // loop_footer_branch
    %18 = sbr.rel target = $region3
  $region8: #{shroomnet_forward.1} parent=0 // loop_exit
    _

</llo_original>
